<compile_context>
chip_gen: v7x
topology: tpu7x:2x2x1
jax: 0.10.0
libtpu: 0.0.40
codegen_flags: <defaults>
</compile_context>

<pallas_src>
import jax
import jax.numpy as jnp
import numpy as np
from jax import lax
from jax.experimental import pallas as pl
from jax.experimental.pallas import tpu as pltpu


def _block_kernel(x_ref, w14_ref, w2f_ref, w3f_ref, b1_ref, b2_ref, b3_ref,
                  out_ref, ypad_ref):
    """One batch element per grid step.

    x_ref   : (1, H2, W2, Cin)  bf16 -- stride-2 subsampled input (even rows/cols)
    w14_ref : (Cin, C0 + C1)    bf16 -- [conv1_w * bn1_scale | shortcut_w]
    w2f_ref : (9*C0, C0)        bf16 -- conv2 (HWIO, flattened) * bn2_scale
    w3f_ref : (C0, C1)          bf16 -- conv3 * bn3_scale
    b1/b2/b3: (1, C)            f32  -- folded BN biases
    out_ref : (1, H2, W2, C1)   bf16
    ypad_ref: (H2+2, W2+2, C0)  bf16 scratch -- zero-padded conv1 output
    """
    _, H2, W2, Cin = x_ref.shape
    C0 = w2f_ref.shape[1]
    C1 = w3f_ref.shape[1]
    f32 = jnp.float32
    bf16 = jnp.bfloat16

    # ---- fused conv1 + shortcut (both 1x1; stride 2 already applied by the layout) ----
    x = x_ref[0].reshape(H2 * W2, Cin)
    fused = jnp.dot(x, w14_ref[...], preferred_element_type=f32)        # (H2*W2, C0+C1)
    y1 = jnp.maximum(fused[:, :C0] + b1_ref[...], 0.0).astype(bf16)     # conv1+bn1+relu
    # Park the shortcut in the already-allocated output block so no wide f32 temp stays
    # live across the conv2/conv3 epilogue; it is re-read for the final residual add.
    out_ref[0] = fused[:, C0:].reshape(H2, W2, C1).astype(out_ref.dtype)

    # ---- zero-padded conv1 output in VMEM scratch (padding = 1) ----
    ypad_ref[:, 0:1, :] = jnp.zeros((H2 + 2, 1, C0), bf16)              # left pad column
    ypad_ref[:, W2 + 1:W2 + 2, :] = jnp.zeros((H2 + 2, 1, C0), bf16)    # right pad column
    ypad_ref[0:1, 1:W2 + 1, :] = jnp.zeros((1, W2, C0), bf16)           # top pad row
    ypad_ref[H2 + 1:H2 + 2, 1:W2 + 1, :] = jnp.zeros((1, W2, C0), bf16) # bottom pad row
    ypad_ref[1:H2 + 1, 1:W2 + 1, :] = y1.reshape(H2, W2, C0)

    # ---- conv2 (3x3, pad 1) as ONE im2col matmul: K = 9*C0 ----
    cols = [ypad_ref[di:di + H2, dj:dj + W2, :]
            for di in range(3) for dj in range(3)]
    patches = jnp.concatenate(cols, axis=-1).reshape(H2 * W2, 9 * C0)
    y2 = jnp.dot(patches, w2f_ref[...], preferred_element_type=f32)
    y2 = jnp.maximum(y2 + b2_ref[...], 0.0).astype(bf16)                # (H2*W2, C0)

    # ---- conv3 (1x1) + bn3, add shortcut, final relu ----
    y3 = jnp.dot(y2, w3f_ref[...], preferred_element_type=f32) + b3_ref[...]
    sc = out_ref[0].reshape(H2 * W2, C1).astype(f32)
    out_ref[0] = jnp.maximum(y3 + sc, 0.0).reshape(H2, W2, C1).astype(out_ref.dtype)


def residual_block_1x1(x_nhwc, params):
    """Pallas forward. x_nhwc: (B, H, W, Cin), H/W even. Returns (B, H/2, W/2, C1) bf16."""
    (w1, w2, w3, w4, s1, b1, s2, b2, s3, b3) = params
    B, H, W, Cin = x_nhwc.shape
    if H % 2 or W % 2:
        raise ValueError("H and W must be even (stride-2 1x1 convs)")
    H2, W2 = H // 2, W // 2
    C0 = w1.shape[1]
    C1 = w3.shape[1]

    f32, bf16 = jnp.float32, jnp.bfloat16

    # Fold the BN scales into the conv weights (one-time constant fold), keep biases.
    w14 = jnp.concatenate([w1 * s1.reshape(1, C0), w4], axis=1).astype(bf16)   # (Cin, C0+C1)
    w2f = (w2 * s2.reshape(1, 1, 1, C0)).reshape(9 * C0, C0).astype(bf16)      # (9*C0, C0)
    w3f = (w3 * s3.reshape(1, C1)).astype(bf16)                                # (C0, C1)
    b1f = b1.reshape(1, C0).astype(f32)
    b2f = b2.reshape(1, C0).astype(f32)
    b3f = b3.reshape(1, C1).astype(f32)

    if Cin % 128 == 0:
        # Metadata-only reshape: (B,H,W,Cin) -> (B,H2,2,W2,2*Cin).  The BlockSpec
        # squeezes the row-parity dim at index 0 (even rows) and takes the FIRST
        # Cin-wide block of the packed last dim (even columns), so only the needed
        # bytes are DMA'd -- odd rows/columns never leave HBM.
        x_in = x_nhwc.astype(bf16).reshape(B, H2, 2, W2, 2 * Cin)
        x_spec = pl.BlockSpec((1, H2, None, W2, Cin), lambda b: (b, 0, 0, 0, 0))
    else:
        # Small-channel fallback (lane rule: block last dim must be a multiple of 128
        # or the full array dim): do the stride-2 subsample with a cheap XLA slice.
        x_in = x_nhwc[:, ::2, ::2, :].astype(bf16)
        x_spec = pl.BlockSpec((1, H2, W2, Cin), lambda b: (b, 0, 0, 0))

    def full(a):
        return pl.BlockSpec(a.shape, lambda b, _nd=a.ndim: (0,) * _nd)

    grid_spec = pltpu.PrefetchScalarGridSpec(
        num_scalar_prefetch=0,
        grid=(B,),    # one even-row image per step; B >= 2 keeps both v7x TCs busy
        in_specs=[x_spec, full(w14), full(w2f), full(w3f),
                  full(b1f), full(b2f), full(b3f)],
        out_specs=pl.BlockSpec((1, H2, W2, C1), lambda b: (b, 0, 0, 0)),
        scratch_shapes=[pltpu.VMEM((H2 + 2, W2 + 2, C0), bf16)],
    )

    # VMEM budget: double-buffered x/out blocks + resident weights (assume 2 buffers)
    # + scratch + large per-step temporaries (patches / fused f32) + headroom.
    weight_bytes = 2 * (w14.size + w2f.size + w3f.size) + 4 * (2 * C0 + C1)
    x_block = 2 * H2 * W2 * Cin
    out_block = 2 * H2 * W2 * C1
    scratch_bytes = 2 * (H2 + 2) * (W2 + 2) * C0
    temp_bytes = (2 * H2 * W2 * 9 * C0            # patches (bf16)
                  + 4 * H2 * W2 * (C0 + C1)       # fused conv1+shortcut (f32)
                  + 4 * H2 * W2 * max(C0, C1))    # conv2/conv3 accumulators (f32)
    est = 2 * weight_bytes + 2 * (x_block + out_block) + scratch_bytes + temp_bytes

    # Generation-aware cap: ~40 MiB on 64 MiB-per-TC parts (v7x), larger on 128 MiB parts.
    try:
        vmem_cap = int(pltpu.get_tpu_info().vmem_capacity_bytes)
    except Exception:
        vmem_cap = 64 * 2 ** 20
    ceiling = 40 * 2 ** 20 if vmem_cap <= 64 * 2 ** 20 else 100 * 2 ** 20
    vmem_limit = int(min(ceiling, max(32 * 2 ** 20, 2 * est)))

    return pl.pallas_call(
        _block_kernel,
        out_shape=jax.ShapeDtypeStruct((B, H2, W2, C1), bf16),
        grid_spec=grid_spec,
        compiler_params=pltpu.CompilerParams(
            dimension_semantics=("parallel",),
            vmem_limit_bytes=vmem_limit),
    )(x_in, w14, w2f, w3f, b1f, b2f, b3f)


def reference_block(x_nhwc, params):
    """Pure-JAX f32 reference using lax.conv_general_dilated (NHWC / HWIO)."""
    (w1, w2, w3, w4, s1, b1, s2, b2, s3, b3) = params
    dn = ("NHWC", "HWIO", "NHWC")
    bn = lambda x, s, b: x * s.reshape(1, 1, 1, -1) + b.reshape(1, 1, 1, -1)
    Cin, C0 = w1.shape
    C1 = w3.shape[1]

    y = lax.conv_general_dilated(x_nhwc, w1.reshape(1, 1, Cin, C0), (2, 2), "VALID",
                                 dimension_numbers=dn)
    y = jax.nn.relu(bn(y, s1, b1))
    y = lax.conv_general_dilated(y, w2, (1, 1), ((1, 1), (1, 1)), dimension_numbers=dn)
    y = jax.nn.relu(bn(y, s2, b2))
    y = lax.conv_general_dilated(y, w3.reshape(1, 1, C0, C1), (1, 1), "VALID",
                                 dimension_numbers=dn)
    y = bn(y, s3, b3)
    sc = lax.conv_general_dilated(x_nhwc, w4.reshape(1, 1, Cin, C1), (2, 2), "VALID",
                                  dimension_numbers=dn)
    return jax.nn.relu(y + sc)


def make_params(key, in_channels, out_channels):
    """Deterministic synthetic parameters. out_channels = (C0, C1) as in the module."""
    C0, C1 = out_channels
    ks = jax.random.split(key, 16)
    f32 = jnp.float32
    w1 = 0.3 * jax.random.normal(ks[0], (in_channels, C0), f32)      # conv1 1x1
    w2 = 0.3 * jax.random.normal(ks[1], (3, 3, C0, C0), f32)          # conv2 3x3 (HWIO)
    w3 = 0.3 * jax.random.normal(ks[2], (C0, C1), f32)                # conv3 1x1
    w4 = 0.3 * jax.random.normal(ks[3], (in_channels, C1), f32)       # shortcut 1x1

    eps = 1e-5

    def bn_fold(kg, kb, km, kv, c):
        gamma = 1.0 + 0.1 * jax.random.normal(kg, (c,), f32)
        beta = 0.1 * jax.random.normal(kb, (c,), f32)
        mean = 0.1 * jax.random.normal(km, (c,), f32)
        var = jax.random.uniform(kv, (c,), f32, minval=0.5, maxval=1.5)
        scale = gamma / jnp.sqrt(var + eps)
        bias = beta - mean * scale
        return scale, bias

    s1, b1 = bn_fold(ks[4], ks[5], ks[6], ks[7], C0)
    s2, b2 = bn_fold(ks[8], ks[9], ks[10], ks[11], C0)
    s3, b3 = bn_fold(ks[12], ks[13], ks[14], ks[15], C1)
    return (w1, w2, w3, w4, s1, b1, s2, b2, s3, b3)


def _run_case(key, B, Cin, H, W, out_channels, rtol=5e-2, atol=5e-2):
    k_x, k_p = jax.random.split(key)
    # PyTorch-convention NCHW input, transposed to NHWC for the kernel.
    x_nchw = jax.random.normal(k_x, (B, Cin, H, W), jnp.float32)
    x_nhwc = jnp.transpose(x_nchw, (0, 2, 3, 1))
    params = make_params(k_p, Cin, out_channels)

    out = jax.block_until_ready(residual_block_1x1(x_nhwc, params))
    ref = jax.block_until_ready(reference_block(x_nhwc, params))

    assert out.shape == (B, H // 2, W // 2, out_channels[1])
    assert out.dtype == jnp.bfloat16
    np.testing.assert_allclose(np.asarray(out.astype(jnp.float32)), np.asarray(ref),
                               rtol=rtol, atol=atol)


if __name__ == "__main__":
    key = jax.random.PRNGKey(0)
    k1, k2 = jax.random.split(key)

    # Small functional test (Cin=4 -> exercises the XLA-slice fallback path).
    _run_case(k1, B=2, Cin=4, H=16, W=16, out_channels=(8, 16))

    # Lane-aligned channel count (Cin=128 -> exercises the trimmed even-column
    # BlockSpec path that the real ResNet shapes use).
    _run_case(k2, B=1, Cin=128, H=8, W=8, out_channels=(8, 16))

    print("KERNEL_OK")
</pallas_src>

<mosaic_0001>
module attributes {stable_mosaic.version = 11 : i64} {
  func.func @_block_kernel(%arg0: i32, %arg1: memref<1x8x8x4xbf16, #tpu.memory_space<vmem>>, %arg2: memref<4x24xbf16, #tpu.memory_space<vmem>>, %arg3: memref<72x8xbf16, #tpu.memory_space<vmem>>, %arg4: memref<8x16xbf16, #tpu.memory_space<vmem>>, %arg5: memref<1x8xf32, #tpu.memory_space<vmem>>, %arg6: memref<1x8xf32, #tpu.memory_space<vmem>>, %arg7: memref<1x16xf32, #tpu.memory_space<vmem>>, %arg8: memref<1x8x8x16xbf16, #tpu.memory_space<vmem>>, %arg9: memref<10x10x8xbf16, #tpu.memory_space<vmem>>) attributes {dimension_semantics = [#tpu.dimension_semantics<parallel>], iteration_bounds = array<i64: 2>, scalar_prefetch = 0 : i64, scratch_operands = 1 : i64, tpu.core_type = #tpu.core_type<tc>, window_params = [{transform_indices = @transform_0, window_bounds = array<i64: 1, 8, 8, 4>}, {pipeline_mode = #tpu.pipeline_mode<synchronous>, transform_indices = @transform_1, window_bounds = array<i64: 4, 24>}, {pipeline_mode = #tpu.pipeline_mode<synchronous>, transform_indices = @transform_2, window_bounds = array<i64: 72, 8>}, {pipeline_mode = #tpu.pipeline_mode<synchronous>, transform_indices = @transform_3, window_bounds = array<i64: 8, 16>}, {pipeline_mode = #tpu.pipeline_mode<synchronous>, transform_indices = @transform_4, window_bounds = array<i64: 1, 8>}, {pipeline_mode = #tpu.pipeline_mode<synchronous>, transform_indices = @transform_5, window_bounds = array<i64: 1, 8>}, {pipeline_mode = #tpu.pipeline_mode<synchronous>, transform_indices = @transform_6, window_bounds = array<i64: 1, 16>}, {transform_indices = @transform_7, window_bounds = array<i64: 1, 8, 8, 16>}]} {
    %c0 = arith.constant 0 : index
    %c0_0 = arith.constant 0 : index
    %c0_1 = arith.constant 0 : index
    %c0_2 = arith.constant 0 : index
    %0 = vector.load %arg1[%c0, %c0_0, %c0_1, %c0_2] : memref<1x8x8x4xbf16, #tpu.memory_space<vmem>>, vector<1x8x8x4xbf16>
    %1 = vector.shape_cast %0 : vector<1x8x8x4xbf16> to vector<8x8x4xbf16>
    %2 = vector.shape_cast %1 : vector<8x8x4xbf16> to vector<64x4xbf16>
    %c0_3 = arith.constant 0 : index
    %c0_4 = arith.constant 0 : index
    %3 = vector.load %arg2[%c0_3, %c0_4] : memref<4x24xbf16, #tpu.memory_space<vmem>>, vector<4x24xbf16>
    %cst = arith.constant dense<0.000000e+00> : vector<64x24xf32>
    %4 = tpu.matmul %2, %3, %cst {dimension_numbers = #tpu.dot_dimension_numbers<[1], [0], [0], [1], [0, 0, 1, 1], [], []>} : vector<64x4xbf16>, vector<4x24xbf16>, vector<64x24xf32> -> vector<64x24xf32>
    %5 = vector.extract_strided_slice %4 {offsets = [0, 0], sizes = [64, 8], strides = [1, 1]} : vector<64x24xf32> to vector<64x8xf32>
    %c0_5 = arith.constant 0 : index
    %c0_6 = arith.constant 0 : index
    %6 = vector.load %arg5[%c0_5, %c0_6] : memref<1x8xf32, #tpu.memory_space<vmem>>, vector<1x8xf32>
    %7 = vector.broadcast %6 : vector<1x8xf32> to vector<64x8xf32>
    %8 = arith.addf %5, %7 : vector<64x8xf32>
    %cst_7 = arith.constant 0.000000e+00 : f32
    %9 = vector.broadcast %cst_7 : f32 to vector<64x8xf32>
    %10 = arith.maximumf %8, %9 : vector<64x8xf32>
    %11 = arith.truncf %10 : vector<64x8xf32> to vector<64x8xbf16>
    %12 = vector.extract_strided_slice %4 {offsets = [0, 8], sizes = [64, 16], strides = [1, 1]} : vector<64x24xf32> to vector<64x16xf32>
    %13 = vector.shape_cast %12 : vector<64x16xf32> to vector<8x8x16xf32>
    %14 = arith.truncf %13 : vector<8x8x16xf32> to vector<8x8x16xbf16>
    %c0_8 = arith.constant 0 : index
    %c0_9 = arith.constant 0 : index
    %c0_10 = arith.constant 0 : index
    %c0_11 = arith.constant 0 : index
    %15 = vector.load %arg8[%c0_8, %c0_9, %c0_10, %c0_11] : memref<1x8x8x16xbf16, #tpu.memory_space<vmem>>, vector<1x8x8x16xbf16>
    %16 = vector.shape_cast %15 : vector<1x8x8x16xbf16> to vector<8x8x16xbf16>
    %17 = vector.shape_cast %14 : vector<8x8x16xbf16> to vector<1x8x8x16xbf16>
    tpu.vector_store %arg8[%c0_8, %c0_9, %c0_10, %c0_11], %17 {strides = array<i32>} : memref<1x8x8x16xbf16, #tpu.memory_space<vmem>>, vector<1x8x8x16xbf16>,
    %cst_12 = arith.constant 0.000000e+00 : bf16
    %18 = vector.broadcast %cst_12 : bf16 to vector<10x1x8xbf16>
    %c0_13 = arith.constant 0 : index
    %c0_14 = arith.constant 0 : index
    %c0_15 = arith.constant 0 : index
    %19 = vector.load %arg9[%c0_13, %c0_14, %c0_15] : memref<10x10x8xbf16, #tpu.memory_space<vmem>>, vector<10x1x8xbf16>
    tpu.vector_store %arg9[%c0_13, %c0_14, %c0_15], %18 {strides = array<i32>} : memref<10x10x8xbf16, #tpu.memory_space<vmem>>, vector<10x1x8xbf16>,
    %cst_16 = arith.constant 0.000000e+00 : bf16
    %20 = vector.broadcast %cst_16 : bf16 to vector<10x1x8xbf16>
    %c0_17 = arith.constant 0 : index
    %c9 = arith.constant 9 : index
    %c0_18 = arith.constant 0 : index
    %21 = vector.load %arg9[%c0_17, %c9, %c0_18] : memref<10x10x8xbf16, #tpu.memory_space<vmem>>, vector<10x1x8xbf16>
    tpu.vector_store %arg9[%c0_17, %c9, %c0_18], %20 {strides = array<i32>} : memref<10x10x8xbf16, #tpu.memory_space<vmem>>, vector<10x1x8xbf16>,
    %cst_19 = arith.constant 0.000000e+00 : bf16
    %22 = vector.broadcast %cst_19 : bf16 to vector<1x8x8xbf16>
    %c0_20 = arith.constant 0 : index
    %c1 = arith.constant 1 : index
    %c0_21 = arith.constant 0 : index
    %23 = vector.load %arg9[%c0_20, %c1, %c0_21] : memref<10x10x8xbf16, #tpu.memory_space<vmem>>, vector<1x8x8xbf16>
    tpu.vector_store %arg9[%c0_20, %c1, %c0_21], %22 {strides = array<i32>} : memref<10x10x8xbf16, #tpu.memory_space<vmem>>, vector<1x8x8xbf16>,
    %cst_22 = arith.constant 0.000000e+00 : bf16
    %24 = vector.broadcast %cst_22 : bf16 to vector<1x8x8xbf16>
    %c9_23 = arith.constant 9 : index
    %c1_24 = arith.constant 1 : index
    %c0_25 = arith.constant 0 : index
    %25 = vector.load %arg9[%c9_23, %c1_24, %c0_25] : memref<10x10x8xbf16, #tpu.memory_space<vmem>>, vector<1x8x8xbf16>
    tpu.vector_store %arg9[%c9_23, %c1_24, %c0_25], %24 {strides = array<i32>} : memref<10x10x8xbf16, #tpu.memory_space<vmem>>, vector<1x8x8xbf16>,
    %26 = vector.shape_cast %11 : vector<64x8xbf16> to vector<8x8x8xbf16>
    %c1_26 = arith.constant 1 : index
    %c1_27 = arith.constant 1 : index
    %c0_28 = arith.constant 0 : index
    %27 = vector.load %arg9[%c1_26, %c1_27, %c0_28] : memref<10x10x8xbf16, #tpu.memory_space<vmem>>, vector<8x8x8xbf16>
    tpu.vector_store %arg9[%c1_26, %c1_27, %c0_28], %26 {strides = array<i32>} : memref<10x10x8xbf16, #tpu.memory_space<vmem>>, vector<8x8x8xbf16>,
    %c0_29 = arith.constant 0 : index
    %c0_30 = arith.constant 0 : index
    %c0_31 = arith.constant 0 : index
    %28 = vector.load %arg9[%c0_29, %c0_30, %c0_31] : memref<10x10x8xbf16, #tpu.memory_space<vmem>>, vector<8x8x8xbf16>
    %c0_32 = arith.constant 0 : index
    %c1_33 = arith.constant 1 : index
    %c0_34 = arith.constant 0 : index
    %29 = vector.load %arg9[%c0_32, %c1_33, %c0_34] : memref<10x10x8xbf16, #tpu.memory_space<vmem>>, vector<8x8x8xbf16>
    %c0_35 = arith.constant 0 : index
    %c2 = arith.constant 2 : index
    %c0_36 = arith.constant 0 : index
    %30 = vector.load %arg9[%c0_35, %c2, %c0_36] : memref<10x10x8xbf16, #tpu.memory_space<vmem>>, vector<8x8x8xbf16>
    %c1_37 = arith.constant 1 : index
    %c0_38 = arith.constant 0 : index
    %c0_39 = arith.constant 0 : index
    %31 = vector.load %arg9[%c1_37, %c0_38, %c0_39] : memref<10x10x8xbf16, #tpu.memory_space<vmem>>, vector<8x8x8xbf16>
    %c1_40 = arith.constant 1 : index
    %c1_41 = arith.constant 1 : index
    %c0_42 = arith.constant 0 : index
    %32 = vector.load %arg9[%c1_40, %c1_41, %c0_42] : memref<10x10x8xbf16, #tpu.memory_space<vmem>>, vector<8x8x8xbf16>
    %c1_43 = arith.constant 1 : index
    %c2_44 = arith.constant 2 : index
    %c0_45 = arith.constant 0 : index
    %33 = vector.load %arg9[%c1_43, %c2_44, %c0_45] : memref<10x10x8xbf16, #tpu.memory_space<vmem>>, vector<8x8x8xbf16>
    %c2_46 = arith.constant 2 : index
    %c0_47 = arith.constant 0 : index
    %c0_48 = arith.constant 0 : index
    %34 = vector.load %arg9[%c2_46, %c0_47, %c0_48] : memref<10x10x8xbf16, #tpu.memory_space<vmem>>, vector<8x8x8xbf16>
    %c2_49 = arith.constant 2 : index
    %c1_50 = arith.constant 1 : index
    %c0_51 = arith.constant 0 : index
    %35 = vector.load %arg9[%c2_49, %c1_50, %c0_51] : memref<10x10x8xbf16, #tpu.memory_space<vmem>>, vector<8x8x8xbf16>
    %c2_52 = arith.constant 2 : index
    %c2_53 = arith.constant 2 : index
    %c0_54 = arith.constant 0 : index
    %36 = vector.load %arg9[%c2_52, %c2_53, %c0_54] : memref<10x10x8xbf16, #tpu.memory_space<vmem>>, vector<8x8x8xbf16>
    %37 = tpu.concatenate %28, %29, %30, %31, %32, %33, %34, %35, %36 in 2 : vector<8x8x8xbf16>, vector<8x8x8xbf16>, vector<8x8x8xbf16>, vector<8x8x8xbf16>, vector<8x8x8xbf16>, vector<8x8x8xbf16>, vector<8x8x8xbf16>, vector<8x8x8xbf16>, vector<8x8x8xbf16> -> vector<8x8x72xbf16>
    %38 = vector.shape_cast %37 : vector<8x8x72xbf16> to vector<64x72xbf16>
    %c0_55 = arith.constant 0 : index
    %c0_56 = arith.constant 0 : index
    %39 = vector.load %arg3[%c0_55, %c0_56] : memref<72x8xbf16, #tpu.memory_space<vmem>>, vector<72x8xbf16>
    %cst_57 = arith.constant dense<0.000000e+00> : vector<64x8xf32>
    %40 = tpu.matmul %38, %39, %cst_57 {dimension_numbers = #tpu.dot_dimension_numbers<[1], [0], [0], [1], [0, 0, 1, 1], [], []>} : vector<64x72xbf16>, vector<72x8xbf16>, vector<64x8xf32> -> vector<64x8xf32>
    %c0_58 = arith.constant 0 : index
    %c0_59 = arith.constant 0 : index
    %41 = vector.load %arg6[%c0_58, %c0_59] : memref<1x8xf32, #tpu.memory_space<vmem>>, vector<1x8xf32>
    %42 = vector.broadcast %41 : vector<1x8xf32> to vector<64x8xf32>
    %43 = arith.addf %40, %42 : vector<64x8xf32>
    %cst_60 = arith.constant 0.000000e+00 : f32
    %44 = vector.broadcast %cst_60 : f32 to vector<64x8xf32>
    %45 = arith.maximumf %43, %44 : vector<64x8xf32>
    %46 = arith.truncf %45 : vector<64x8xf32> to vector<64x8xbf16>
    %c0_61 = arith.constant 0 : index
    %c0_62 = arith.constant 0 : index
    %47 = vector.load %arg4[%c0_61, %c0_62] : memref<8x16xbf16, #tpu.memory_space<vmem>>, vector<8x16xbf16>
    %cst_63 = arith.constant dense<0.000000e+00> : vector<64x16xf32>
    %48 = tpu.matmul %46, %47, %cst_63 {dimension_numbers = #tpu.dot_dimension_numbers<[1], [0], [0], [1], [0, 0, 1, 1], [], []>} : vector<64x8xbf16>, vector<8x16xbf16>, vector<64x16xf32> -> vector<64x16xf32>
    %c0_64 = arith.constant 0 : index
    %c0_65 = arith.constant 0 : index
    %49 = vector.load %arg7[%c0_64, %c0_65] : memref<1x16xf32, #tpu.memory_space<vmem>>, vector<1x16xf32>
    %50 = vector.broadcast %49 : vector<1x16xf32> to vector<64x16xf32>
    %51 = arith.addf %48, %50 : vector<64x16xf32>
    %c0_66 = arith.constant 0 : index
    %c0_67 = arith.constant 0 : index
    %c0_68 = arith.constant 0 : index
    %c0_69 = arith.constant 0 : index
    %52 = vector.load %arg8[%c0_66, %c0_67, %c0_68, %c0_69] : memref<1x8x8x16xbf16, #tpu.memory_space<vmem>>, vector<1x8x8x16xbf16>
    %53 = vector.shape_cast %52 : vector<1x8x8x16xbf16> to vector<8x8x16xbf16>
    %54 = vector.shape_cast %53 : vector<8x8x16xbf16> to vector<64x16xbf16>
    %55 = arith.extf %54 : vector<64x16xbf16> to vector<64x16xf32>
    %56 = arith.addf %51, %55 : vector<64x16xf32>
    %cst_70 = arith.constant 0.000000e+00 : f32
    %57 = vector.broadcast %cst_70 : f32 to vector<64x16xf32>
    %58 = arith.maximumf %56, %57 : vector<64x16xf32>
    %59 = vector.shape_cast %58 : vector<64x16xf32> to vector<8x8x16xf32>
    %60 = arith.truncf %59 : vector<8x8x16xf32> to vector<8x8x16xbf16>
    %c0_71 = arith.constant 0 : index
    %c0_72 = arith.constant 0 : index
    %c0_73 = arith.constant 0 : index
    %c0_74 = arith.constant 0 : index
    %61 = vector.load %arg8[%c0_71, %c0_72, %c0_73, %c0_74] : memref<1x8x8x16xbf16, #tpu.memory_space<vmem>>, vector<1x8x8x16xbf16>
    %62 = vector.shape_cast %61 : vector<1x8x8x16xbf16> to vector<8x8x16xbf16>
    %63 = vector.shape_cast %60 : vector<8x8x16xbf16> to vector<1x8x8x16xbf16>
    tpu.vector_store %arg8[%c0_71, %c0_72, %c0_73, %c0_74], %63 {strides = array<i32>} : memref<1x8x8x16xbf16, #tpu.memory_space<vmem>>, vector<1x8x8x16xbf16>,
    return
  }
  func.func @transform_0(%arg0: i32) -> (i32, i32, i32, i32) {
    %c0_i32 = arith.constant 0 : i32
    %c0_i32_0 = arith.constant 0 : i32
    %c0_i32_1 = arith.constant 0 : i32
    %c0_i32_2 = arith.constant 0 : i32
    return %arg0, %c0_i32, %c0_i32_0, %c0_i32_1 : i32, i32, i32, i32
  }
  func.func @transform_1(%arg0: i32) -> (i32, i32) {
    %c0_i32 = arith.constant 0 : i32
    %c0_i32_0 = arith.constant 0 : i32
    %c0_i32_1 = arith.constant 0 : i32
    return %c0_i32, %c0_i32_0 : i32, i32
  }
  func.func @transform_2(%arg0: i32) -> (i32, i32) {
    %c0_i32 = arith.constant 0 : i32
    %c0_i32_0 = arith.constant 0 : i32
    %c0_i32_1 = arith.constant 0 : i32
    return %c0_i32, %c0_i32_0 : i32, i32
  }
  func.func @transform_3(%arg0: i32) -> (i32, i32) {
    %c0_i32 = arith.constant 0 : i32
    %c0_i32_0 = arith.constant 0 : i32
    %c0_i32_1 = arith.constant 0 : i32
    return %c0_i32, %c0_i32_0 : i32, i32
  }
  func.func @transform_4(%arg0: i32) -> (i32, i32) {
    %c0_i32 = arith.constant 0 : i32
    %c0_i32_0 = arith.constant 0 : i32
    %c0_i32_1 = arith.constant 0 : i32
    return %c0_i32, %c0_i32_0 : i32, i32
  }
  func.func @transform_5(%arg0: i32) -> (i32, i32) {
    %c0_i32 = arith.constant 0 : i32
    %c0_i32_0 = arith.constant 0 : i32
    %c0_i32_1 = arith.constant 0 : i32
    return %c0_i32, %c0_i32_0 : i32, i32
  }
  func.func @transform_6(%arg0: i32) -> (i32, i32) {
    %c0_i32 = arith.constant 0 : i32
    %c0_i32_0 = arith.constant 0 : i32
    %c0_i32_1 = arith.constant 0 : i32
    return %c0_i32, %c0_i32_0 : i32, i32
  }
  func.func @transform_7(%arg0: i32) -> (i32, i32, i32, i32) {
    %c0_i32 = arith.constant 0 : i32
    %c0_i32_0 = arith.constant 0 : i32
    %c0_i32_1 = arith.constant 0 : i32
    %c0_i32_2 = arith.constant 0 : i32
    return %arg0, %c0_i32, %c0_i32_0, %c0_i32_1 : i32, i32, i32, i32
  }
}

</mosaic_0001>

<llo_original>
// kernel: tpu_custom_call.1
$region0: #{tpu_custom_call.1}
  #allocation0 [shape = 'u32[]', space=smem, size = 0x4, offset = 0x4, fixed_abs, tag = 'smem constant byte address 0x4 - core index']
  #allocation1 [shape = 'u32[144,128]{1,0:T(1,128)}', space=vmem, size = 0x12000, scoped, tag = 'internal scratch']
  #allocation2 [shape = 'bf16[10,10,8]{2,1,0:T(8,128)(2,1)}', space=vmem, size = 0xa000, scoped, tag = 'scratch operand']
  %s0 = inlined_call_operand.vmem [shape: bf16[2,8,8,4], index: 0, kind: input, shape index: {}]
  %s1 = inlined_call_operand.vmem [shape: bf16[4,24], index: 1, kind: input, shape index: {}]
  %s2 = inlined_call_operand.vmem [shape: bf16[72,8], index: 2, kind: input, shape index: {}]
  %s3 = inlined_call_operand.vmem [shape: bf16[8,16], index: 3, kind: input, shape index: {}]
  %s4 = inlined_call_operand.vmem [shape: f32[1,8], index: 4, kind: input, shape index: {}]
  %s5 = inlined_call_operand.vmem [shape: f32[1,8], index: 5, kind: input, shape index: {}]
  %s6 = inlined_call_operand.vmem [shape: f32[1,16], index: 6, kind: input, shape index: {}]
  %s7 = inlined_call_operand.hbm [shape: bf16[2,8,8,16], index: 7, kind: output, shape index: {}]
  %s8 = sld [smem:[#allocation0]]
  $region61: #{tpu_custom_call.1} parent=0
    _
  %s10 = ssub.s32 1, %s8
  %s11 = scalar_select 0, %s10, %s8
  $region1: #{tpu_custom_call.1} parent=0
    #allocation3 [shape = 'u8[32768]{0}', space=vmem, size = 0x8000, scoped, tag = 'output window, operand 0']
    #allocation4 [shape = 's32[2]{0}', space=sflag, size = 0x8, scoped, tag = 'scoped memory for tpu_custom_call.1']
    %12 = vsyncpa [#allocation4], 0
    %s13 = scalar_lea.sflag [#allocation4], 1
    %14 = vsyncpa %s13, 0
    loop: start=0, step=1, limit=4
    $region2: #{tpu_custom_call.1} parent=1 // loop_pre_header
      _
    $region3: #{tpu_custom_call.1} parent=1 // loop_header
      %s16 = sphi 0, %s20
      %p17 = scmp.ge.s32.totalorder %s16, 4
      %s26 = sphi 0, %s28
      %s29 = sphi 0, %s26
      %s30 = sphi 0, %s29
      %s46 = sphi 0, %s30
      %s50 = sphi 0, %s50
      %s52 = sphi 0, %s50
      %s53 = sphi 0, %s52
      %s67 = sphi 0, %s53
      %s71 = sphi 0, %s71
      %s73 = sphi 0, %s71
      %s74 = sphi 0, %s73
      %s88 = sphi 0, %s74
      %s92 = sphi 0, %s92
      %s94 = sphi 0, %s92
      %s95 = sphi 0, %s94
      %s109 = sphi 0, %s95
      %s113 = sphi 0, %s113
      %s115 = sphi 0, %s113
      %s116 = sphi 0, %s115
      %s130 = sphi 0, %s116
      %s134 = sphi 0, %s134
      %s136 = sphi 0, %s134
      %s137 = sphi 0, %s136
      %s151 = sphi 0, %s137
      %s155 = sphi 0, %s155
      %s157 = sphi 0, %s155
      %s158 = sphi 0, %s157
      %s172 = sphi 0, %s158
      %s178 = sphi 0, %s180
      %s181 = sphi 0, %s178
      %s182 = sphi 0, %s181
      %s198 = sphi 0, %s182
    $region4: #{tpu_custom_call.1} parent=1 // loop_header_branch
      %19 = sbr.rel (%p17) target = $region8
    $region5: #{tpu_custom_call.1} parent=1 // loop_body
      %s21 = ssub.s32 %s16, 1
      %s22 = ssub.s32 %s16, 2
      %s23 = sadd.s32 %s16, 1
      %s24 = ssub.s32 %s16, %s23
      %p25 = scmp.eq.s32.totalorder %s24, 0
      %s27 = sadd.s32 %s26, 1
      %s28 = scalar_select %p25, %s26, %s27
      %p31 = pneg %p25
      %p32 = scmp.eq.s32.totalorder %s16, 1
      %p33 = por %p31, %p32
      %p34 = scmp.ne.s32.totalorder %s26, %s29
      %p35 = scmp.eq.s32.totalorder %s16, 0
      %p36 = por %p34, %p35
      %p37 = scmp.ne.s32.totalorder %s26, %s29
      %p38 = scmp.eq.s32.totalorder %s21, 1
      %p39 = por %p37, %p38
      %p40 = scmp.ne.s32.totalorder %s29, %s30
      %p41 = scmp.eq.s32.totalorder %s21, 0
      %p42 = por %p40, %p41
      %p43 = scmp.ne.s32.totalorder %s29, %s30
      %p44 = scmp.eq.s32.totalorder %s22, 1
      %p45 = por %p43, %p44
      %p47 = scmp.ne.s32.totalorder %s30, %s46
      %p48 = scmp.eq.s32.totalorder %s22, 0
      %p49 = por %p47, %p48
      %s51 = sadd.s32 %s50, 1
      %p54 = scmp.eq.s32.totalorder %s16, 1
      %p55 = scmp.ne.s32.totalorder %s50, %s52
      %p56 = scmp.eq.s32.totalorder %s16, 0
      %p57 = por %p55, %p56
      %p58 = scmp.ne.s32.totalorder %s50, %s52
      %p59 = scmp.eq.s32.totalorder %s21, 1
      %p60 = por %p58, %p59
      %p61 = scmp.ne.s32.totalorder %s52, %s53
      %p62 = scmp.eq.s32.totalorder %s21, 0
      %p63 = por %p61, %p62
      %p64 = scmp.ne.s32.totalorder %s52, %s53
      %p65 = scmp.eq.s32.totalorder %s22, 1
      %p66 = por %p64, %p65
      %p68 = scmp.ne.s32.totalorder %s53, %s67
      %p69 = scmp.eq.s32.totalorder %s22, 0
      %p70 = por %p68, %p69
      %s72 = sadd.s32 %s71, 1
      %p75 = scmp.eq.s32.totalorder %s16, 1
      %p76 = scmp.ne.s32.totalorder %s71, %s73
      %p77 = scmp.eq.s32.totalorder %s16, 0
      %p78 = por %p76, %p77
      %p79 = scmp.ne.s32.totalorder %s71, %s73
      %p80 = scmp.eq.s32.totalorder %s21, 1
      %p81 = por %p79, %p80
      %p82 = scmp.ne.s32.totalorder %s73, %s74
      %p83 = scmp.eq.s32.totalorder %s21, 0
      %p84 = por %p82, %p83
      %p85 = scmp.ne.s32.totalorder %s73, %s74
      %p86 = scmp.eq.s32.totalorder %s22, 1
      %p87 = por %p85, %p86
      %p89 = scmp.ne.s32.totalorder %s74, %s88
      %p90 = scmp.eq.s32.totalorder %s22, 0
      %p91 = por %p89, %p90
      %s93 = sadd.s32 %s92, 1
      %p96 = scmp.eq.s32.totalorder %s16, 1
      %p97 = scmp.ne.s32.totalorder %s92, %s94
      %p98 = scmp.eq.s32.totalorder %s16, 0
      %p99 = por %p97, %p98
      %p100 = scmp.ne.s32.totalorder %s92, %s94
      %p101 = scmp.eq.s32.totalorder %s21, 1
      %p102 = por %p100, %p101
      %p103 = scmp.ne.s32.totalorder %s94, %s95
      %p104 = scmp.eq.s32.totalorder %s21, 0
      %p105 = por %p103, %p104
      %p106 = scmp.ne.s32.totalorder %s94, %s95
      %p107 = scmp.eq.s32.totalorder %s22, 1
      %p108 = por %p106, %p107
      %p110 = scmp.ne.s32.totalorder %s95, %s109
      %p111 = scmp.eq.s32.totalorder %s22, 0
      %p112 = por %p110, %p111
      %s114 = sadd.s32 %s113, 1
      %p117 = scmp.eq.s32.totalorder %s16, 1
      %p118 = scmp.ne.s32.totalorder %s113, %s115
      %p119 = scmp.eq.s32.totalorder %s16, 0
      %p120 = por %p118, %p119
      %p121 = scmp.ne.s32.totalorder %s113, %s115
      %p122 = scmp.eq.s32.totalorder %s21, 1
      %p123 = por %p121, %p122
      %p124 = scmp.ne.s32.totalorder %s115, %s116
      %p125 = scmp.eq.s32.totalorder %s21, 0
      %p126 = por %p124, %p125
      %p127 = scmp.ne.s32.totalorder %s115, %s116
      %p128 = scmp.eq.s32.totalorder %s22, 1
      %p129 = por %p127, %p128
      %p131 = scmp.ne.s32.totalorder %s116, %s130
      %p132 = scmp.eq.s32.totalorder %s22, 0
      %p133 = por %p131, %p132
      %s135 = sadd.s32 %s134, 1
      %p138 = scmp.eq.s32.totalorder %s16, 1
      %p139 = scmp.ne.s32.totalorder %s134, %s136
      %p140 = scmp.eq.s32.totalorder %s16, 0
      %p141 = por %p139, %p140
      %p142 = scmp.ne.s32.totalorder %s134, %s136
      %p143 = scmp.eq.s32.totalorder %s21, 1
      %p144 = por %p142, %p143
      %p145 = scmp.ne.s32.totalorder %s136, %s137
      %p146 = scmp.eq.s32.totalorder %s21, 0
      %p147 = por %p145, %p146
      %p148 = scmp.ne.s32.totalorder %s136, %s137
      %p149 = scmp.eq.s32.totalorder %s22, 1
      %p150 = por %p148, %p149
      %p152 = scmp.ne.s32.totalorder %s137, %s151
      %p153 = scmp.eq.s32.totalorder %s22, 0
      %p154 = por %p152, %p153
      %s156 = sadd.s32 %s155, 1
      %p159 = scmp.eq.s32.totalorder %s16, 1
      %p160 = scmp.ne.s32.totalorder %s155, %s157
      %p161 = scmp.eq.s32.totalorder %s16, 0
      %p162 = por %p160, %p161
      %p163 = scmp.ne.s32.totalorder %s155, %s157
      %p164 = scmp.eq.s32.totalorder %s21, 1
      %p165 = por %p163, %p164
      %p166 = scmp.ne.s32.totalorder %s157, %s158
      %p167 = scmp.eq.s32.totalorder %s21, 0
      %p168 = por %p166, %p167
      %p169 = scmp.ne.s32.totalorder %s157, %s158
      %p170 = scmp.eq.s32.totalorder %s22, 1
      %p171 = por %p169, %p170
      %p173 = scmp.ne.s32.totalorder %s158, %s172
      %p174 = scmp.eq.s32.totalorder %s22, 0
      %p175 = por %p173, %p174
      %s176 = ssub.s32 %s16, %s23
      %p177 = scmp.eq.s32.totalorder %s176, 0
      %s179 = sadd.s32 %s178, 1
      %s180 = scalar_select %p177, %s178, %s179
      %p183 = pneg %p177
      %p184 = scmp.eq.s32.totalorder %s16, 1
      %p185 = por %p183, %p184
      %p186 = scmp.ne.s32.totalorder %s178, %s181
      %p187 = scmp.eq.s32.totalorder %s16, 0
      %p188 = por %p186, %p187
      %p189 = scmp.ne.s32.totalorder %s178, %s181
      %p190 = scmp.eq.s32.totalorder %s21, 1
      %p191 = por %p189, %p190
      %p192 = scmp.ne.s32.totalorder %s181, %s182
      %p193 = scmp.eq.s32.totalorder %s21, 0
      %p194 = por %p192, %p193
      %p195 = scmp.ne.s32.totalorder %s181, %s182
      %p196 = scmp.eq.s32.totalorder %s22, 1
      %p197 = por %p195, %p196
      %p199 = scmp.ne.s32.totalorder %s182, %s198
      %p200 = scmp.eq.s32.totalorder %s22, 0
      %p201 = por %p199, %p200
      %p202 = scmp.le.s32.totalorder 1, %s16
      %p203 = scmp.lt.s32.totalorder %s16, 3
      %p204 = pnand %p202, %p203
      %p205 = pneg %p204
      // Predicated region
      $region9: #{tpu_custom_call.1} parent=5 // pred_check
        _
      $region10: #{tpu_custom_call.1} parent=5 // pred_check_branch
        %207 = sbr.rel (%p204) target = $region12
      $region11: #{tpu_custom_call.1} parent=5 // pred_region
        %s208 = ssub.s32 %s16, 1
        // Predicated region
        $region13: #{tpu_custom_call.1} parent=11 // pred_check
          %p209 = pneg %p63
        $region14: #{tpu_custom_call.1} parent=11 // pred_check_branch
          %211 = sbr.rel (%p209) target = $region16
        $region15: #{tpu_custom_call.1} parent=11 // pred_region
          _
        $region16: #{tpu_custom_call.1} parent=11 // pred_fallthru
          _
        // Predicated region
        $region17: #{tpu_custom_call.1} parent=11 // pred_check
          %p212 = pneg %p84
        $region18: #{tpu_custom_call.1} parent=11 // pred_check_branch
          %214 = sbr.rel (%p212) target = $region20
        $region19: #{tpu_custom_call.1} parent=11 // pred_region
          _
        $region20: #{tpu_custom_call.1} parent=11 // pred_fallthru
          _
        // Predicated region
        $region21: #{tpu_custom_call.1} parent=11 // pred_check
          %p215 = pneg %p105
        $region22: #{tpu_custom_call.1} parent=11 // pred_check_branch
          %217 = sbr.rel (%p215) target = $region24
        $region23: #{tpu_custom_call.1} parent=11 // pred_region
          _
        $region24: #{tpu_custom_call.1} parent=11 // pred_fallthru
          _
        // Predicated region
        $region25: #{tpu_custom_call.1} parent=11 // pred_check
          %p218 = pneg %p126
        $region26: #{tpu_custom_call.1} parent=11 // pred_check_branch
          %220 = sbr.rel (%p218) target = $region28
        $region27: #{tpu_custom_call.1} parent=11 // pred_region
          _
        $region28: #{tpu_custom_call.1} parent=11 // pred_fallthru
          _
        // Predicated region
        $region29: #{tpu_custom_call.1} parent=11 // pred_check
          %p221 = pneg %p147
        $region30: #{tpu_custom_call.1} parent=11 // pred_check_branch
          %223 = sbr.rel (%p221) target = $region32
        $region31: #{tpu_custom_call.1} parent=11 // pred_region
          _
        $region32: #{tpu_custom_call.1} parent=11 // pred_fallthru
          _
        // Predicated region
        $region33: #{tpu_custom_call.1} parent=11 // pred_check
          %p224 = pneg %p168
        $region34: #{tpu_custom_call.1} parent=11 // pred_check_branch
          %226 = sbr.rel (%p224) target = $region36
        $region35: #{tpu_custom_call.1} parent=11 // pred_region
          _
        $region36: #{tpu_custom_call.1} parent=11 // pred_fallthru
          _
      $region12: #{tpu_custom_call.1} parent=5 // pred_fallthru
        _
      %p227 = scmp.lt.s32.totalorder %s16, 2
      // Predicated region
      $region37: #{tpu_custom_call.1} parent=5 // pred_check
        %p228 = pneg %p227
      $region38: #{tpu_custom_call.1} parent=5 // pred_check_branch
        %230 = sbr.rel (%p228) target = $region40
      $region39: #{tpu_custom_call.1} parent=5 // pred_region
        // Predicated region
        $region41: #{tpu_custom_call.1} parent=39 // pred_check
          %p231 = pneg %p36
        $region42: #{tpu_custom_call.1} parent=39 // pred_check_branch
          %233 = sbr.rel (%p231) target = $region44
        $region43: #{tpu_custom_call.1} parent=39 // pred_region
          %p234 = scmp.lt.s32.totalorder %s16, 1
          %s235 = scalar_select %p234, %s16, 1
          %s236 = smul.addr %s235, 8
          %s237 = smul.addr %s236, 4
          %s238 = scalar_lea.vmem %s0, %s237
        $region44: #{tpu_custom_call.1} parent=39 // pred_fallthru
          _
      $region40: #{tpu_custom_call.1} parent=5 // pred_fallthru
        _
      %p239 = scmp.le.s32.totalorder 1, %s16
      %p240 = scmp.lt.s32.totalorder %s16, 3
      %p241 = pnand %p239, %p240
      %p242 = pneg %p241
      // Predicated region
      $region45: #{tpu_custom_call.1} parent=5 // pred_check
        _
      $region46: #{tpu_custom_call.1} parent=5 // pred_check_branch
        %244 = sbr.rel (%p241) target = $region48
      $region47: #{tpu_custom_call.1} parent=5 // pred_region
        %s245 = ssub.s32 %s16, 1
        %p246 = scmp.lt.s32.totalorder %s21, 1
        %s247 = scalar_select %p246, %s21, 1
        %s248 = smul.addr %s247, 8
        %s249 = smul.addr %s248, 4
        %s250 = scalar_lea.vmem %s0, %s249
        %p251 = pneg %p42
        %p252 = pneg %p39
        %p253 = pneg %p63
        %p254 = pneg %p60
        %p255 = pneg %p84
        %p256 = pneg %p81
        %p257 = pneg %p105
        %p258 = pneg %p102
        %p259 = pneg %p126
        %p260 = pneg %p123
        %p261 = pneg %p147
        %p262 = pneg %p144
        %p263 = pneg %p168
        %p264 = pneg %p165
        %p265 = pneg %p194
        %p266 = pneg %p191
        %s267 = sand.u32 %s181, 1
        %s268 = scalar_lea.sflag [#allocation4], %s267
        %s269 = sand.u32 %s181, 1
        %s270 = smul.addr %s269, 32
        %s271 = scalar_lea.vmem [#allocation3], %s270
        %p272 = scmp.lt.s32.totalorder %s21, 1
        %s273 = scalar_select %p272, %s21, 1
        %s274 = smul.addr %s273, 8
        %s275 = smul.addr %s274, 4
        %s276 = scalar_lea.vmem %s0, %s275
        %v278 = vld [vmem:[%s276] sm:$0xf]
        %v279 = vld [vmem:[%s276 + $0x4] sm:$0xf]
        %v280 = vld [vmem:[%s276 + $0x8] sm:$0xf]
        %v281 = vld [vmem:[%s276 + $0xc] sm:$0xf]
        %v282 = vld [vmem:[%s276 + $0x10] sm:$0xf]
        %v283 = vld [vmem:[%s276 + $0x14] sm:$0xf]
        %v284 = vld [vmem:[%s276 + $0x18] sm:$0xf]
        %v285 = vld [vmem:[%s276 + $0x1c] sm:$0xf]
        %v286 = vld [vmem:[%s1] sm:$0x3]
        %v295 = vunpack.c.l.b16 %v278
        %v296 = vunpack.c.l.b16 %v279
        %v297 = vunpack.c.l.b16 %v280
        %v298 = vunpack.c.l.b16 %v281
        %v299 = vunpack.c.l.b16 %v282
        %v300 = vunpack.c.l.b16 %v283
        %v301 = vunpack.c.l.b16 %v284
        %v302 = vunpack.c.l.b16 %v285
        %v303 = vpack.c.b16 %v296, %v295
        %v304 = vpack.c.b16 %v298, %v297
        %v305 = vpack.c.b16 %v300, %v299
        %v306 = vpack.c.b16 %v302, %v301
        %vm307 = vcmask 31744
        %v309 = vsel %vm307, %v303, 0
        %v312 = vsel %vm307, %v304, 0
        %v315 = vsel %vm307, %v305, 0
        %v318 = vsel %vm307, %v306, 0
        %vm320 = vcmask 1041408
        %v322 = vsel %vm320, %v286, 0
        %324 = vmatprep.subr.bf16.mxu0 0
        %325 = vmatpush1.bf16.msra.mxu0 %v322
        %326 = vmatprep.subr.bf16.mxu0 0
        %327 = vmatpush1.bf16.msra.mxu0 0
        %328 = vmatprep.subr.bf16.mxu0 0
        %329 = vmatpush1.bf16.msra.mxu0 0
        %330 = vmatprep.subr.bf16.mxu0 0
        %331 = vmatpush1.bf16.msra.mxu0 0
        %332 = vmatprep.subr.bf16.mxu0 0
        %333 = vmatpush1.bf16.msra.mxu0 0
        %334 = vmatprep.subr.bf16.mxu0 0
        %335 = vmatpush1.bf16.msra.mxu0 0
        %336 = vmatprep.subr.bf16.mxu0 0
        %337 = vmatpush1.bf16.msra.mxu0 0
        %338 = vmatprep.subr.bf16.mxu0 0
        %339 = vmatpush1.bf16.msra.mxu0 0
        %340 = vmatprep.subr.bf16.mxu0 0
        %341 = vmatpush1.bf16.msra.mxu0 0
        %342 = vmatprep.subr.bf16.mxu0 0
        %343 = vmatpush1.bf16.msra.mxu0 0
        %344 = vmatprep.subr.bf16.mxu0 0
        %345 = vmatpush1.bf16.msra.mxu0 0
        %346 = vmatprep.subr.bf16.mxu0 0
        %347 = vmatpush1.bf16.msra.mxu0 0
        %348 = vmatprep.subr.bf16.mxu0 0
        %349 = vmatpush1.bf16.msra.mxu0 0
        %350 = vmatprep.subr.bf16.mxu0 0
        %351 = vmatpush1.bf16.msra.mxu0 0
        %352 = vmatprep.subr.bf16.mxu0 0
        %353 = vmatpush1.bf16.msra.mxu0 0
        %354 = vmatprep.subr.bf16.mxu0 0
        %355 = vmatpush1.bf16.msra.mxu0 0
        %356 = vmatprep.mubr.bf16.mxu0 0
        %357 = vmatmul.mubr.bf16.gmra.mrb[0].mxu0 %v309
        %v358 = vpop.f32.mrb[0].mxu0
        %v359 = vadd.f32 0.0, %v358
        %v360 = vpop.f32.mrb[0].mxu0
        %v361 = vpop.f32.mrb[0].mxu0
        %v362 = vadd.f32 0.0, %v361
        %v363 = vpop.f32.mrb[0].mxu0
        %364 = vmatprep.mubr.bf16.mxu0 0
        %365 = vmatmul.mubr.bf16.gmra.mrb[0].mxu0 %v312
        %v366 = vpop.f32.mrb[0].mxu0
        %v367 = vadd.f32 0.0, %v366
        %v368 = vpop.f32.mrb[0].mxu0
        %v369 = vpop.f32.mrb[0].mxu0
        %v370 = vadd.f32 0.0, %v369
        %v371 = vpop.f32.mrb[0].mxu0
        %372 = vmatprep.mubr.bf16.mxu0 0
        %373 = vmatmul.mubr.bf16.gmra.mrb[0].mxu0 %v315
        %v374 = vpop.f32.mrb[0].mxu0
        %v375 = vadd.f32 0.0, %v374
        %v376 = vpop.f32.mrb[0].mxu0
        %v377 = vpop.f32.mrb[0].mxu0
        %v378 = vadd.f32 0.0, %v377
        %v379 = vpop.f32.mrb[0].mxu0
        %380 = vmatprep.mubr.bf16.mxu0 0
        %381 = vmatmul.mubr.bf16.gmra.mrb[0].mxu0 %v318
        %v382 = vpop.f32.mrb[0].mxu0
        %v383 = vadd.f32 0.0, %v382
        %v384 = vpop.f32.mrb[0].mxu0
        %v385 = vpop.f32.mrb[0].mxu0
        %v386 = vadd.f32 0.0, %v385
        %v387 = vpop.f32.mrb[0].mxu0
        %388 = vdwg.mxu0
        %v389 = vld [vmem:[%s4] sm:$0x1]
        %v391 = vlaneseq
        %v392 = vshrl.u32 %v391, 7
        %v393 = vsub.s32 0, %v392
        %v394 = vrot.slane %v389, %v393
        %v396 = vadd.f32 %v359, %v394
        %v397 = vadd.f32 %v362, %v394
        %v398 = vadd.f32 %v367, %v394
        %v399 = vadd.f32 %v370, %v394
        %v400 = vadd.f32 %v375, %v394
        %v401 = vadd.f32 %v378, %v394
        %v402 = vadd.f32 %v383, %v394
        %v403 = vadd.f32 %v386, %v394
        %v404 = vmax.f32 %v396, 0.0
        %v405 = vmax.f32 %v397, 0.0
        %v406 = vmax.f32 %v398, 0.0
        %v407 = vmax.f32 %v399, 0.0
        %v408 = vmax.f32 %v400, 0.0
        %v409 = vmax.f32 %v401, 0.0
        %v410 = vmax.f32 %v402, 0.0
        %v411 = vmax.f32 %v403, 0.0
        %v412 = vpack.c.bf16 %v405, %v404
        %v413 = vpack.c.bf16 %v407, %v406
        %v414 = vpack.c.bf16 %v409, %v408
        %v415 = vpack.c.bf16 %v411, %v410
        %v416 = vpack.c.bf16 %v359, %v359
        %v417 = vpack.c.bf16 %v362, %v362
        %v418 = vpack.c.bf16 %v367, %v367
        %v419 = vpack.c.bf16 %v370, %v370
        %v420 = vpack.c.bf16 %v375, %v375
        %v421 = vpack.c.bf16 %v378, %v378
        %v422 = vpack.c.bf16 %v383, %v383
        %v423 = vpack.c.bf16 %v386, %v386
        %v432 = vunpack.c.l.b16 %v416
        %v433 = vunpack.c.l.b16 %v417
        %v434 = vunpack.c.l.b16 %v418
        %v435 = vunpack.c.l.b16 %v419
        %v436 = vunpack.c.l.b16 %v420
        %v437 = vunpack.c.l.b16 %v421
        %v438 = vunpack.c.l.b16 %v422
        %v439 = vunpack.c.l.b16 %v423
        %v440 = vpack.c.b16 %v432, %v432
        %v441 = vpack.c.b16 %v433, %v433
        %v442 = vpack.c.b16 %v434, %v434
        %v443 = vpack.c.b16 %v435, %v435
        %v444 = vpack.c.b16 %v436, %v436
        %v445 = vpack.c.b16 %v437, %v437
        %v446 = vpack.c.b16 %v438, %v438
        %v447 = vpack.c.b16 %v439, %v439
        %448 = vrot.lane.b32.xlu0 %v440, 120
        %v449 = vpop.permute.xlu0 %448
        %450 = vrot.lane.b32.xlu0 %v441, 120
        %v451 = vpop.permute.xlu0 %450
        %452 = vrot.lane.b32.xlu0 %v442, 120
        %v453 = vpop.permute.xlu0 %452
        %454 = vrot.lane.b32.xlu0 %v443, 120
        %v455 = vpop.permute.xlu0 %454
        %456 = vrot.lane.b32.xlu0 %v444, 120
        %v457 = vpop.permute.xlu0 %456
        %458 = vrot.lane.b32.xlu0 %v445, 120
        %v459 = vpop.permute.xlu0 %458
        %460 = vrot.lane.b32.xlu0 %v446, 120
        %v461 = vpop.permute.xlu0 %460
        %462 = vrot.lane.b32.xlu0 %v447, 120
        %v463 = vpop.permute.xlu0 %462
        %vm472 = vcmask 125952
        %473 = vst.msk [vmem:[%s271] sm:$0xf] %vm472, %v449
        %474 = vst.msk [vmem:[%s271 + $0x4] sm:$0xf] %vm472, %v451
        %475 = vst.msk [vmem:[%s271 + $0x8] sm:$0xf] %vm472, %v453
        %476 = vst.msk [vmem:[%s271 + $0xc] sm:$0xf] %vm472, %v455
        %477 = vst.msk [vmem:[%s271 + $0x10] sm:$0xf] %vm472, %v457
        %478 = vst.msk [vmem:[%s271 + $0x14] sm:$0xf] %vm472, %v459
        %479 = vst.msk [vmem:[%s271 + $0x18] sm:$0xf] %vm472, %v461
        %480 = vst.msk [vmem:[%s271 + $0x1c] sm:$0xf] %vm472, %v463
        %vm481 = vcmask 57344
        %vm482 = vsmask.f32 256
        %vm483 = vmand %vm481, %vm482
        %v484 = vld [vmem:[#allocation2] sm:$0x1]
        %v485 = vsel %vm483, 0, %v484
        %486 = vst [vmem:[#allocation2] sm:$0x1] %v485
        %v487 = vld [vmem:[#allocation2 + $0x8] sm:$0x1]
        %v488 = vsel %vm483, 0, %v487
        %489 = vst [vmem:[#allocation2 + $0x8] sm:$0x1] %v488
        %v490 = vld [vmem:[#allocation2 + $0x10] sm:$0x1]
        %v491 = vsel %vm483, 0, %v490
        %492 = vst [vmem:[#allocation2 + $0x10] sm:$0x1] %v491
        %v493 = vld [vmem:[#allocation2 + $0x18] sm:$0x1]
        %v494 = vsel %vm483, 0, %v493
        %495 = vst [vmem:[#allocation2 + $0x18] sm:$0x1] %v494
        %v496 = vld [vmem:[#allocation2 + $0x20] sm:$0x1]
        %v497 = vsel %vm483, 0, %v496
        %498 = vst [vmem:[#allocation2 + $0x20] sm:$0x1] %v497
        %v499 = vld [vmem:[#allocation2 + $0x28] sm:$0x1]
        %v500 = vsel %vm483, 0, %v499
        %501 = vst [vmem:[#allocation2 + $0x28] sm:$0x1] %v500
        %v502 = vld [vmem:[#allocation2 + $0x30] sm:$0x1]
        %v503 = vsel %vm483, 0, %v502
        %504 = vst [vmem:[#allocation2 + $0x30] sm:$0x1] %v503
        %v505 = vld [vmem:[#allocation2 + $0x38] sm:$0x1]
        %v506 = vsel %vm483, 0, %v505
        %507 = vst [vmem:[#allocation2 + $0x38] sm:$0x1] %v506
        %v508 = vld [vmem:[#allocation2 + $0x40] sm:$0x1]
        %v509 = vsel %vm483, 0, %v508
        %510 = vst [vmem:[#allocation2 + $0x40] sm:$0x1] %v509
        %v511 = vld [vmem:[#allocation2 + $0x48] sm:$0x1]
        %v512 = vsel %vm483, 0, %v511
        %513 = vst [vmem:[#allocation2 + $0x48] sm:$0x1] %v512
        %vm514 = vsmask.f32 7938
        %vm515 = vmand %vm481, %vm514
        %v516 = vld [vmem:[#allocation2 + $0x4] sm:$0x1]
        %v517 = vsel %vm515, 0, %v516
        %518 = vst [vmem:[#allocation2 + $0x4] sm:$0x1] %v517
        %v519 = vld [vmem:[#allocation2 + $0xc] sm:$0x1]
        %v520 = vsel %vm515, 0, %v519
        %521 = vst [vmem:[#allocation2 + $0xc] sm:$0x1] %v520
        %v522 = vld [vmem:[#allocation2 + $0x14] sm:$0x1]
        %v523 = vsel %vm515, 0, %v522
        %524 = vst [vmem:[#allocation2 + $0x14] sm:$0x1] %v523
        %v525 = vld [vmem:[#allocation2 + $0x1c] sm:$0x1]
        %v526 = vsel %vm515, 0, %v525
        %527 = vst [vmem:[#allocation2 + $0x1c] sm:$0x1] %v526
        %v528 = vld [vmem:[#allocation2 + $0x24] sm:$0x1]
        %v529 = vsel %vm515, 0, %v528
        %530 = vst [vmem:[#allocation2 + $0x24] sm:$0x1] %v529
        %v531 = vld [vmem:[#allocation2 + $0x2c] sm:$0x1]
        %v532 = vsel %vm515, 0, %v531
        %533 = vst [vmem:[#allocation2 + $0x2c] sm:$0x1] %v532
        %v534 = vld [vmem:[#allocation2 + $0x34] sm:$0x1]
        %v535 = vsel %vm515, 0, %v534
        %536 = vst [vmem:[#allocation2 + $0x34] sm:$0x1] %v535
        %v537 = vld [vmem:[#allocation2 + $0x3c] sm:$0x1]
        %v538 = vsel %vm515, 0, %v537
        %539 = vst [vmem:[#allocation2 + $0x3c] sm:$0x1] %v538
        %v540 = vld [vmem:[#allocation2 + $0x44] sm:$0x1]
        %v541 = vsel %vm515, 0, %v540
        %542 = vst [vmem:[#allocation2 + $0x44] sm:$0x1] %v541
        %v543 = vld [vmem:[#allocation2 + $0x4c] sm:$0x1]
        %v544 = vsel %vm515, 0, %v543
        %545 = vst [vmem:[#allocation2 + $0x4c] sm:$0x1] %v544
        %vm546 = vcmask 60416
        %vm547 = vmand %vm546, %vm514
        %v548 = vld [vmem:[#allocation2] sm:$0xf]
        %v549 = vsel %vm547, 0, %v548
        %550 = vst [vmem:[#allocation2] sm:$0xf] %v549
        %v551 = vld [vmem:[#allocation2 + $0x4] sm:$0x1]
        %v552 = vsel %vm483, 0, %v551
        %553 = vst [vmem:[#allocation2 + $0x4] sm:$0x1] %v552
        %s554 = scalar_lea.vmem [#allocation2], 72
        %v555 = vld [vmem:[%s554] sm:$0xf]
        %v556 = vsel %vm547, 0, %v555
        %557 = vst [vmem:[%s554] sm:$0xf] %v556
        %v558 = vld [vmem:[%s554 + $0x4] sm:$0x1]
        %v559 = vsel %vm483, 0, %v558
        %560 = vst [vmem:[%s554 + $0x4] sm:$0x1] %v559
        %v565 = vunpack.c.l.b16 %v412
        %v566 = vunpack.c.h.b16 %v412
        %v567 = vunpack.c.l.b16 %v413
        %v568 = vunpack.c.h.b16 %v413
        %v569 = vunpack.c.l.b16 %v414
        %v570 = vunpack.c.h.b16 %v414
        %v571 = vunpack.c.l.b16 %v415
        %v572 = vunpack.c.h.b16 %v415
        %v573 = vpack.c.b16 %v565, %v565
        %v574 = vpack.c.b16 %v566, %v566
        %v575 = vpack.c.b16 %v567, %v567
        %v576 = vpack.c.b16 %v568, %v568
        %v577 = vpack.c.b16 %v569, %v569
        %v578 = vpack.c.b16 %v570, %v570
        %v579 = vpack.c.b16 %v571, %v571
        %v580 = vpack.c.b16 %v572, %v572
        %v582 = vshrl.u32 %v573, 16
        %v584 = vrot.slane %v582, 7
        %v585 = vshll.u32 %v573, 16
        %v587 = vor.u32 %v584, %v585
        %v588 = vrot.slane %v584, 4
        %v590 = vshrl.u32 %v574, 16
        %v592 = vrot.slane %v590, 7
        %v593 = vshll.u32 %v574, 16
        %v595 = vor.u32 %v592, %v593
        %v596 = vrot.slane %v592, 4
        %v598 = vshrl.u32 %v575, 16
        %v600 = vrot.slane %v598, 7
        %v601 = vshll.u32 %v575, 16
        %v603 = vor.u32 %v600, %v601
        %v604 = vrot.slane %v600, 4
        %v606 = vshrl.u32 %v576, 16
        %v608 = vrot.slane %v606, 7
        %v609 = vshll.u32 %v576, 16
        %v611 = vor.u32 %v608, %v609
        %v612 = vrot.slane %v608, 4
        %v614 = vshrl.u32 %v577, 16
        %v616 = vrot.slane %v614, 7
        %v617 = vshll.u32 %v577, 16
        %v619 = vor.u32 %v616, %v617
        %v620 = vrot.slane %v616, 4
        %v622 = vshrl.u32 %v578, 16
        %v624 = vrot.slane %v622, 7
        %v625 = vshll.u32 %v578, 16
        %v627 = vor.u32 %v624, %v625
        %v628 = vrot.slane %v624, 4
        %v630 = vshrl.u32 %v579, 16
        %v632 = vrot.slane %v630, 7
        %v633 = vshll.u32 %v579, 16
        %v635 = vor.u32 %v632, %v633
        %v636 = vrot.slane %v632, 4
        %v638 = vshrl.u32 %v580, 16
        %v640 = vrot.slane %v638, 7
        %v641 = vshll.u32 %v580, 16
        %v643 = vor.u32 %v640, %v641
        %v644 = vrot.slane %v640, 4
        %s661 = scalar_lea.vmem [#allocation2], 8
        %v662 = vld [vmem:[%s661] sm:$0xf]
        %v663 = vsel %vm547, %v587, %v662
        %664 = vst [vmem:[%s661] sm:$0xf] %v663
        %v665 = vld [vmem:[%s661 + $0x4] sm:$0x1]
        %v666 = vsel %vm483, %v588, %v665
        %667 = vst [vmem:[%s661 + $0x4] sm:$0x1] %v666
        %v668 = vld [vmem:[%s661 + $0x8] sm:$0xf]
        %v669 = vsel %vm547, %v595, %v668
        %670 = vst [vmem:[%s661 + $0x8] sm:$0xf] %v669
        %v671 = vld [vmem:[%s661 + $0xc] sm:$0x1]
        %v672 = vsel %vm483, %v596, %v671
        %673 = vst [vmem:[%s661 + $0xc] sm:$0x1] %v672
        %v674 = vld [vmem:[%s661 + $0x10] sm:$0xf]
        %v675 = vsel %vm547, %v603, %v674
        %676 = vst [vmem:[%s661 + $0x10] sm:$0xf] %v675
        %v677 = vld [vmem:[%s661 + $0x14] sm:$0x1]
        %v678 = vsel %vm483, %v604, %v677
        %679 = vst [vmem:[%s661 + $0x14] sm:$0x1] %v678
        %v680 = vld [vmem:[%s661 + $0x18] sm:$0xf]
        %v681 = vsel %vm547, %v611, %v680
        %682 = vst [vmem:[%s661 + $0x18] sm:$0xf] %v681
        %v683 = vld [vmem:[%s661 + $0x1c] sm:$0x1]
        %v684 = vsel %vm483, %v612, %v683
        %685 = vst [vmem:[%s661 + $0x1c] sm:$0x1] %v684
        %v686 = vld [vmem:[%s661 + $0x20] sm:$0xf]
        %v687 = vsel %vm547, %v619, %v686
        %688 = vst [vmem:[%s661 + $0x20] sm:$0xf] %v687
        %v689 = vld [vmem:[%s661 + $0x24] sm:$0x1]
        %v690 = vsel %vm483, %v620, %v689
        %691 = vst [vmem:[%s661 + $0x24] sm:$0x1] %v690
        %v692 = vld [vmem:[%s661 + $0x28] sm:$0xf]
        %v693 = vsel %vm547, %v627, %v692
        %694 = vst [vmem:[%s661 + $0x28] sm:$0xf] %v693
        %v695 = vld [vmem:[%s661 + $0x2c] sm:$0x1]
        %v696 = vsel %vm483, %v628, %v695
        %697 = vst [vmem:[%s661 + $0x2c] sm:$0x1] %v696
        %v698 = vld [vmem:[%s661 + $0x30] sm:$0xf]
        %v699 = vsel %vm547, %v635, %v698
        %700 = vst [vmem:[%s661 + $0x30] sm:$0xf] %v699
        %v701 = vld [vmem:[%s661 + $0x34] sm:$0x1]
        %v702 = vsel %vm483, %v636, %v701
        %703 = vst [vmem:[%s661 + $0x34] sm:$0x1] %v702
        %v704 = vld [vmem:[%s661 + $0x38] sm:$0xf]
        %v705 = vsel %vm547, %v643, %v704
        %706 = vst [vmem:[%s661 + $0x38] sm:$0xf] %v705
        %v707 = vld [vmem:[%s661 + $0x3c] sm:$0x1]
        %v708 = vsel %vm483, %v644, %v707
        %709 = vst [vmem:[%s661 + $0x3c] sm:$0x1] %v708
        %v710 = vld [vmem:[#allocation2] sm:$0xf]
        %v711 = vld [vmem:[#allocation2 + $0x8] sm:$0xf]
        %v712 = vld [vmem:[#allocation2 + $0x10] sm:$0xf]
        %v713 = vld [vmem:[#allocation2 + $0x18] sm:$0xf]
        %v714 = vld [vmem:[#allocation2 + $0x20] sm:$0xf]
        %v715 = vld [vmem:[#allocation2 + $0x28] sm:$0xf]
        %v716 = vld [vmem:[#allocation2 + $0x30] sm:$0xf]
        %v717 = vld [vmem:[#allocation2 + $0x38] sm:$0xf]
        %v718 = vld [vmem:[#allocation2 + $0x4] sm:$0x1]
        %v719 = vld [vmem:[#allocation2 + $0xc] sm:$0x1]
        %v720 = vld [vmem:[#allocation2 + $0x14] sm:$0x1]
        %v721 = vld [vmem:[#allocation2 + $0x1c] sm:$0x1]
        %v722 = vld [vmem:[#allocation2 + $0x24] sm:$0x1]
        %v723 = vld [vmem:[#allocation2 + $0x2c] sm:$0x1]
        %v724 = vld [vmem:[#allocation2 + $0x34] sm:$0x1]
        %v725 = vld [vmem:[#allocation2 + $0x3c] sm:$0x1]
        %v726 = vld [vmem:[#allocation2] sm:$0xe]
        %v727 = vld [vmem:[#allocation2 + $0x8] sm:$0xe]
        %v728 = vld [vmem:[#allocation2 + $0x10] sm:$0xe]
        %v729 = vld [vmem:[#allocation2 + $0x18] sm:$0xe]
        %v730 = vld [vmem:[#allocation2 + $0x20] sm:$0xe]
        %v731 = vld [vmem:[#allocation2 + $0x28] sm:$0xe]
        %v732 = vld [vmem:[#allocation2 + $0x30] sm:$0xe]
        %v733 = vld [vmem:[#allocation2 + $0x38] sm:$0xe]
        %v734 = vld [vmem:[%s661] sm:$0xf]
        %v735 = vld [vmem:[%s661 + $0x8] sm:$0xf]
        %v736 = vld [vmem:[%s661 + $0x10] sm:$0xf]
        %v737 = vld [vmem:[%s661 + $0x18] sm:$0xf]
        %v738 = vld [vmem:[%s661 + $0x20] sm:$0xf]
        %v739 = vld [vmem:[%s661 + $0x28] sm:$0xf]
        %v740 = vld [vmem:[%s661 + $0x30] sm:$0xf]
        %v741 = vld [vmem:[%s661 + $0x38] sm:$0xf]
        %v742 = vld [vmem:[%s661 + $0x4] sm:$0x1]
        %v743 = vld [vmem:[%s661 + $0xc] sm:$0x1]
        %v744 = vld [vmem:[%s661 + $0x14] sm:$0x1]
        %v745 = vld [vmem:[%s661 + $0x1c] sm:$0x1]
        %v746 = vld [vmem:[%s661 + $0x24] sm:$0x1]
        %v747 = vld [vmem:[%s661 + $0x2c] sm:$0x1]
        %v748 = vld [vmem:[%s661 + $0x34] sm:$0x1]
        %v749 = vld [vmem:[%s661 + $0x3c] sm:$0x1]
        %v750 = vld [vmem:[%s661] sm:$0xe]
        %v751 = vld [vmem:[%s661 + $0x8] sm:$0xe]
        %v752 = vld [vmem:[%s661 + $0x10] sm:$0xe]
        %v753 = vld [vmem:[%s661 + $0x18] sm:$0xe]
        %v754 = vld [vmem:[%s661 + $0x20] sm:$0xe]
        %v755 = vld [vmem:[%s661 + $0x28] sm:$0xe]
        %v756 = vld [vmem:[%s661 + $0x30] sm:$0xe]
        %v757 = vld [vmem:[%s661 + $0x38] sm:$0xe]
        %s758 = scalar_lea.vmem [#allocation2], 16
        %v759 = vld [vmem:[%s758] sm:$0xf]
        %v760 = vld [vmem:[%s758 + $0x8] sm:$0xf]
        %v761 = vld [vmem:[%s758 + $0x10] sm:$0xf]
        %v762 = vld [vmem:[%s758 + $0x18] sm:$0xf]
        %v763 = vld [vmem:[%s758 + $0x20] sm:$0xf]
        %v764 = vld [vmem:[%s758 + $0x28] sm:$0xf]
        %v765 = vld [vmem:[%s758 + $0x30] sm:$0xf]
        %v766 = vld [vmem:[%s758 + $0x38] sm:$0xf]
        %v767 = vld [vmem:[%s758 + $0x4] sm:$0x1]
        %v768 = vld [vmem:[%s758 + $0xc] sm:$0x1]
        %v769 = vld [vmem:[%s758 + $0x14] sm:$0x1]
        %v770 = vld [vmem:[%s758 + $0x1c] sm:$0x1]
        %v771 = vld [vmem:[%s758 + $0x24] sm:$0x1]
        %v772 = vld [vmem:[%s758 + $0x2c] sm:$0x1]
        %v773 = vld [vmem:[%s758 + $0x34] sm:$0x1]
        %v774 = vld [vmem:[%s758 + $0x3c] sm:$0x1]
        %v775 = vld [vmem:[%s758] sm:$0xe]
        %v776 = vld [vmem:[%s758 + $0x8] sm:$0xe]
        %v777 = vld [vmem:[%s758 + $0x10] sm:$0xe]
        %v778 = vld [vmem:[%s758 + $0x18] sm:$0xe]
        %v779 = vld [vmem:[%s758 + $0x20] sm:$0xe]
        %v780 = vld [vmem:[%s758 + $0x28] sm:$0xe]
        %v781 = vld [vmem:[%s758 + $0x30] sm:$0xe]
        %v782 = vld [vmem:[%s758 + $0x38] sm:$0xe]
        %v799 = vunpack.c.l.b16 %v710
        %v800 = vunpack.c.l.b16 %v718
        %v801 = vunpack.c.l.b16 %v711
        %v802 = vunpack.c.l.b16 %v719
        %v803 = vunpack.c.l.b16 %v712
        %v804 = vunpack.c.l.b16 %v720
        %v805 = vunpack.c.l.b16 %v713
        %v806 = vunpack.c.l.b16 %v721
        %v807 = vunpack.c.l.b16 %v714
        %v808 = vunpack.c.l.b16 %v722
        %v809 = vunpack.c.l.b16 %v715
        %v810 = vunpack.c.l.b16 %v723
        %v811 = vunpack.c.l.b16 %v716
        %v812 = vunpack.c.l.b16 %v724
        %v813 = vunpack.c.l.b16 %v717
        %v814 = vunpack.c.l.b16 %v725
        %v815 = vpack.c.b16 %v800, %v799
        %v816 = vpack.c.b16 %v802, %v801
        %v817 = vpack.c.b16 %v804, %v803
        %v818 = vpack.c.b16 %v806, %v805
        %v819 = vpack.c.b16 %v808, %v807
        %v820 = vpack.c.b16 %v810, %v809
        %v821 = vpack.c.b16 %v812, %v811
        %v822 = vpack.c.b16 %v814, %v813
        %v824 = vshrl.u32 %v815, 16
        %v826 = vshll.u32 %v815, 16
        %v828 = vrot.slane %v826, 1
        %v829 = vor.u32 %v824, %v828
        %v831 = vshrl.u32 %v816, 16
        %v833 = vshll.u32 %v816, 16
        %v835 = vrot.slane %v833, 1
        %v836 = vor.u32 %v831, %v835
        %v838 = vshrl.u32 %v817, 16
        %v840 = vshll.u32 %v817, 16
        %v842 = vrot.slane %v840, 1
        %v843 = vor.u32 %v838, %v842
        %v845 = vshrl.u32 %v818, 16
        %v847 = vshll.u32 %v818, 16
        %v849 = vrot.slane %v847, 1
        %v850 = vor.u32 %v845, %v849
        %v852 = vshrl.u32 %v819, 16
        %v854 = vshll.u32 %v819, 16
        %v856 = vrot.slane %v854, 1
        %v857 = vor.u32 %v852, %v856
        %v859 = vshrl.u32 %v820, 16
        %v861 = vshll.u32 %v820, 16
        %v863 = vrot.slane %v861, 1
        %v864 = vor.u32 %v859, %v863
        %v866 = vshrl.u32 %v821, 16
        %v868 = vshll.u32 %v821, 16
        %v870 = vrot.slane %v868, 1
        %v871 = vor.u32 %v866, %v870
        %v873 = vshrl.u32 %v822, 16
        %v875 = vshll.u32 %v822, 16
        %v877 = vrot.slane %v875, 1
        %v878 = vor.u32 %v873, %v877
        %879 = vrot.lane.b32.xlu0 %v829, 8
        %v880 = vpop.permute.xlu0 %879
        %881 = vrot.lane.b32.xlu0 %v836, 8
        %v882 = vpop.permute.xlu0 %881
        %883 = vrot.lane.b32.xlu0 %v843, 8
        %v884 = vpop.permute.xlu0 %883
        %885 = vrot.lane.b32.xlu0 %v850, 8
        %v886 = vpop.permute.xlu0 %885
        %887 = vrot.lane.b32.xlu0 %v857, 8
        %v888 = vpop.permute.xlu0 %887
        %889 = vrot.lane.b32.xlu0 %v864, 8
        %v890 = vpop.permute.xlu0 %889
        %891 = vrot.lane.b32.xlu0 %v871, 8
        %v892 = vpop.permute.xlu0 %891
        %893 = vrot.lane.b32.xlu0 %v878, 8
        %v894 = vpop.permute.xlu0 %893
        %v903 = vunpack.c.l.b16 %v726
        %v904 = vunpack.c.l.b16 %v727
        %v905 = vunpack.c.l.b16 %v728
        %v906 = vunpack.c.l.b16 %v729
        %v907 = vunpack.c.l.b16 %v730
        %v908 = vunpack.c.l.b16 %v731
        %v909 = vunpack.c.l.b16 %v732
        %v910 = vunpack.c.l.b16 %v733
        %v911 = vpack.c.b16 %v800, %v903
        %v912 = vpack.c.b16 %v802, %v904
        %v913 = vpack.c.b16 %v804, %v905
        %v914 = vpack.c.b16 %v806, %v906
        %v915 = vpack.c.b16 %v808, %v907
        %v916 = vpack.c.b16 %v810, %v908
        %v917 = vpack.c.b16 %v812, %v909
        %v918 = vpack.c.b16 %v814, %v910
        %v919 = vrot.slane %v911, 1
        %v920 = vrot.slane %v912, 1
        %v921 = vrot.slane %v913, 1
        %v922 = vrot.slane %v914, 1
        %v923 = vrot.slane %v915, 1
        %v924 = vrot.slane %v916, 1
        %v925 = vrot.slane %v917, 1
        %v926 = vrot.slane %v918, 1
        %927 = vrot.lane.b32.xlu0 %v919, 16
        %v928 = vpop.permute.xlu0 %927
        %929 = vrot.lane.b32.xlu0 %v920, 16
        %v930 = vpop.permute.xlu0 %929
        %931 = vrot.lane.b32.xlu0 %v921, 16
        %v932 = vpop.permute.xlu0 %931
        %933 = vrot.lane.b32.xlu0 %v922, 16
        %v934 = vpop.permute.xlu0 %933
        %935 = vrot.lane.b32.xlu0 %v923, 16
        %v936 = vpop.permute.xlu0 %935
        %937 = vrot.lane.b32.xlu0 %v924, 16
        %v938 = vpop.permute.xlu0 %937
        %939 = vrot.lane.b32.xlu0 %v925, 16
        %v940 = vpop.permute.xlu0 %939
        %941 = vrot.lane.b32.xlu0 %v926, 16
        %v942 = vpop.permute.xlu0 %941
        %v951 = vunpack.c.l.b16 %v734
        %v952 = vunpack.c.l.b16 %v735
        %v953 = vunpack.c.l.b16 %v736
        %v954 = vunpack.c.l.b16 %v737
        %v955 = vunpack.c.l.b16 %v738
        %v956 = vunpack.c.l.b16 %v739
        %v957 = vunpack.c.l.b16 %v740
        %v958 = vunpack.c.l.b16 %v741
        %v959 = vpack.c.b16 %v951, %v951
        %v960 = vpack.c.b16 %v952, %v952
        %v961 = vpack.c.b16 %v953, %v953
        %v962 = vpack.c.b16 %v954, %v954
        %v963 = vpack.c.b16 %v955, %v955
        %v964 = vpack.c.b16 %v956, %v956
        %v965 = vpack.c.b16 %v957, %v957
        %v966 = vpack.c.b16 %v958, %v958
        %967 = vrot.lane.b32.xlu0 %v959, 24
        %v968 = vpop.permute.xlu0 %967
        %969 = vrot.lane.b32.xlu0 %v960, 24
        %v970 = vpop.permute.xlu0 %969
        %971 = vrot.lane.b32.xlu0 %v961, 24
        %v972 = vpop.permute.xlu0 %971
        %973 = vrot.lane.b32.xlu0 %v962, 24
        %v974 = vpop.permute.xlu0 %973
        %975 = vrot.lane.b32.xlu0 %v963, 24
        %v976 = vpop.permute.xlu0 %975
        %977 = vrot.lane.b32.xlu0 %v964, 24
        %v978 = vpop.permute.xlu0 %977
        %979 = vrot.lane.b32.xlu0 %v965, 24
        %v980 = vpop.permute.xlu0 %979
        %981 = vrot.lane.b32.xlu0 %v966, 24
        %v982 = vpop.permute.xlu0 %981
        %v991 = vunpack.c.l.b16 %v742
        %v992 = vunpack.c.l.b16 %v743
        %v993 = vunpack.c.l.b16 %v744
        %v994 = vunpack.c.l.b16 %v745
        %v995 = vunpack.c.l.b16 %v746
        %v996 = vunpack.c.l.b16 %v747
        %v997 = vunpack.c.l.b16 %v748
        %v998 = vunpack.c.l.b16 %v749
        %v999 = vpack.c.b16 %v991, %v951
        %v1000 = vpack.c.b16 %v992, %v952
        %v1001 = vpack.c.b16 %v993, %v953
        %v1002 = vpack.c.b16 %v994, %v954
        %v1003 = vpack.c.b16 %v995, %v955
        %v1004 = vpack.c.b16 %v996, %v956
        %v1005 = vpack.c.b16 %v997, %v957
        %v1006 = vpack.c.b16 %v998, %v958
        %v1008 = vshrl.u32 %v999, 16
        %v1010 = vshll.u32 %v999, 16
        %v1012 = vrot.slane %v1010, 1
        %v1013 = vor.u32 %v1008, %v1012
        %v1015 = vshrl.u32 %v1000, 16
        %v1017 = vshll.u32 %v1000, 16
        %v1019 = vrot.slane %v1017, 1
        %v1020 = vor.u32 %v1015, %v1019
        %v1022 = vshrl.u32 %v1001, 16
        %v1024 = vshll.u32 %v1001, 16
        %v1026 = vrot.slane %v1024, 1
        %v1027 = vor.u32 %v1022, %v1026
        %v1029 = vshrl.u32 %v1002, 16
        %v1031 = vshll.u32 %v1002, 16
        %v1033 = vrot.slane %v1031, 1
        %v1034 = vor.u32 %v1029, %v1033
        %v1036 = vshrl.u32 %v1003, 16
        %v1038 = vshll.u32 %v1003, 16
        %v1040 = vrot.slane %v1038, 1
        %v1041 = vor.u32 %v1036, %v1040
        %v1043 = vshrl.u32 %v1004, 16
        %v1045 = vshll.u32 %v1004, 16
        %v1047 = vrot.slane %v1045, 1
        %v1048 = vor.u32 %v1043, %v1047
        %v1050 = vshrl.u32 %v1005, 16
        %v1052 = vshll.u32 %v1005, 16
        %v1054 = vrot.slane %v1052, 1
        %v1055 = vor.u32 %v1050, %v1054
        %v1057 = vshrl.u32 %v1006, 16
        %v1059 = vshll.u32 %v1006, 16
        %v1061 = vrot.slane %v1059, 1
        %v1062 = vor.u32 %v1057, %v1061
        %1063 = vrot.lane.b32.xlu0 %v1013, 32
        %v1064 = vpop.permute.xlu0 %1063
        %1065 = vrot.lane.b32.xlu0 %v1020, 32
        %v1066 = vpop.permute.xlu0 %1065
        %1067 = vrot.lane.b32.xlu0 %v1027, 32
        %v1068 = vpop.permute.xlu0 %1067
        %1069 = vrot.lane.b32.xlu0 %v1034, 32
        %v1070 = vpop.permute.xlu0 %1069
        %1071 = vrot.lane.b32.xlu0 %v1041, 32
        %v1072 = vpop.permute.xlu0 %1071
        %1073 = vrot.lane.b32.xlu0 %v1048, 32
        %v1074 = vpop.permute.xlu0 %1073
        %1075 = vrot.lane.b32.xlu0 %v1055, 32
        %v1076 = vpop.permute.xlu0 %1075
        %1077 = vrot.lane.b32.xlu0 %v1062, 32
        %v1078 = vpop.permute.xlu0 %1077
        %v1087 = vunpack.c.l.b16 %v750
        %v1088 = vunpack.c.l.b16 %v751
        %v1089 = vunpack.c.l.b16 %v752
        %v1090 = vunpack.c.l.b16 %v753
        %v1091 = vunpack.c.l.b16 %v754
        %v1092 = vunpack.c.l.b16 %v755
        %v1093 = vunpack.c.l.b16 %v756
        %v1094 = vunpack.c.l.b16 %v757
        %v1095 = vpack.c.b16 %v991, %v1087
        %v1096 = vpack.c.b16 %v992, %v1088
        %v1097 = vpack.c.b16 %v993, %v1089
        %v1098 = vpack.c.b16 %v994, %v1090
        %v1099 = vpack.c.b16 %v995, %v1091
        %v1100 = vpack.c.b16 %v996, %v1092
        %v1101 = vpack.c.b16 %v997, %v1093
        %v1102 = vpack.c.b16 %v998, %v1094
        %v1103 = vrot.slane %v1095, 1
        %v1104 = vrot.slane %v1096, 1
        %v1105 = vrot.slane %v1097, 1
        %v1106 = vrot.slane %v1098, 1
        %v1107 = vrot.slane %v1099, 1
        %v1108 = vrot.slane %v1100, 1
        %v1109 = vrot.slane %v1101, 1
        %v1110 = vrot.slane %v1102, 1
        %1111 = vrot.lane.b32.xlu0 %v1103, 40
        %v1112 = vpop.permute.xlu0 %1111
        %1113 = vrot.lane.b32.xlu0 %v1104, 40
        %v1114 = vpop.permute.xlu0 %1113
        %1115 = vrot.lane.b32.xlu0 %v1105, 40
        %v1116 = vpop.permute.xlu0 %1115
        %1117 = vrot.lane.b32.xlu0 %v1106, 40
        %v1118 = vpop.permute.xlu0 %1117
        %1119 = vrot.lane.b32.xlu0 %v1107, 40
        %v1120 = vpop.permute.xlu0 %1119
        %1121 = vrot.lane.b32.xlu0 %v1108, 40
        %v1122 = vpop.permute.xlu0 %1121
        %1123 = vrot.lane.b32.xlu0 %v1109, 40
        %v1124 = vpop.permute.xlu0 %1123
        %1125 = vrot.lane.b32.xlu0 %v1110, 40
        %v1126 = vpop.permute.xlu0 %1125
        %v1135 = vunpack.c.l.b16 %v759
        %v1136 = vunpack.c.l.b16 %v760
        %v1137 = vunpack.c.l.b16 %v761
        %v1138 = vunpack.c.l.b16 %v762
        %v1139 = vunpack.c.l.b16 %v763
        %v1140 = vunpack.c.l.b16 %v764
        %v1141 = vunpack.c.l.b16 %v765
        %v1142 = vunpack.c.l.b16 %v766
        %v1143 = vpack.c.b16 %v1135, %v1135
        %v1144 = vpack.c.b16 %v1136, %v1136
        %v1145 = vpack.c.b16 %v1137, %v1137
        %v1146 = vpack.c.b16 %v1138, %v1138
        %v1147 = vpack.c.b16 %v1139, %v1139
        %v1148 = vpack.c.b16 %v1140, %v1140
        %v1149 = vpack.c.b16 %v1141, %v1141
        %v1150 = vpack.c.b16 %v1142, %v1142
        %1151 = vrot.lane.b32.xlu0 %v1143, 48
        %v1152 = vpop.permute.xlu0 %1151
        %1153 = vrot.lane.b32.xlu0 %v1144, 48
        %v1154 = vpop.permute.xlu0 %1153
        %1155 = vrot.lane.b32.xlu0 %v1145, 48
        %v1156 = vpop.permute.xlu0 %1155
        %1157 = vrot.lane.b32.xlu0 %v1146, 48
        %v1158 = vpop.permute.xlu0 %1157
        %1159 = vrot.lane.b32.xlu0 %v1147, 48
        %v1160 = vpop.permute.xlu0 %1159
        %1161 = vrot.lane.b32.xlu0 %v1148, 48
        %v1162 = vpop.permute.xlu0 %1161
        %1163 = vrot.lane.b32.xlu0 %v1149, 48
        %v1164 = vpop.permute.xlu0 %1163
        %1165 = vrot.lane.b32.xlu0 %v1150, 48
        %v1166 = vpop.permute.xlu0 %1165
        %v1175 = vunpack.c.l.b16 %v767
        %v1176 = vunpack.c.l.b16 %v768
        %v1177 = vunpack.c.l.b16 %v769
        %v1178 = vunpack.c.l.b16 %v770
        %v1179 = vunpack.c.l.b16 %v771
        %v1180 = vunpack.c.l.b16 %v772
        %v1181 = vunpack.c.l.b16 %v773
        %v1182 = vunpack.c.l.b16 %v774
        %v1183 = vpack.c.b16 %v1175, %v1135
        %v1184 = vpack.c.b16 %v1176, %v1136
        %v1185 = vpack.c.b16 %v1177, %v1137
        %v1186 = vpack.c.b16 %v1178, %v1138
        %v1187 = vpack.c.b16 %v1179, %v1139
        %v1188 = vpack.c.b16 %v1180, %v1140
        %v1189 = vpack.c.b16 %v1181, %v1141
        %v1190 = vpack.c.b16 %v1182, %v1142
        %v1192 = vshrl.u32 %v1183, 16
        %v1194 = vshll.u32 %v1183, 16
        %v1196 = vrot.slane %v1194, 1
        %v1197 = vor.u32 %v1192, %v1196
        %v1199 = vshrl.u32 %v1184, 16
        %v1201 = vshll.u32 %v1184, 16
        %v1203 = vrot.slane %v1201, 1
        %v1204 = vor.u32 %v1199, %v1203
        %v1206 = vshrl.u32 %v1185, 16
        %v1208 = vshll.u32 %v1185, 16
        %v1210 = vrot.slane %v1208, 1
        %v1211 = vor.u32 %v1206, %v1210
        %v1213 = vshrl.u32 %v1186, 16
        %v1215 = vshll.u32 %v1186, 16
        %v1217 = vrot.slane %v1215, 1
        %v1218 = vor.u32 %v1213, %v1217
        %v1220 = vshrl.u32 %v1187, 16
        %v1222 = vshll.u32 %v1187, 16
        %v1224 = vrot.slane %v1222, 1
        %v1225 = vor.u32 %v1220, %v1224
        %v1227 = vshrl.u32 %v1188, 16
        %v1229 = vshll.u32 %v1188, 16
        %v1231 = vrot.slane %v1229, 1
        %v1232 = vor.u32 %v1227, %v1231
        %v1234 = vshrl.u32 %v1189, 16
        %v1236 = vshll.u32 %v1189, 16
        %v1238 = vrot.slane %v1236, 1
        %v1239 = vor.u32 %v1234, %v1238
        %v1241 = vshrl.u32 %v1190, 16
        %v1243 = vshll.u32 %v1190, 16
        %v1245 = vrot.slane %v1243, 1
        %v1246 = vor.u32 %v1241, %v1245
        %1247 = vrot.lane.b32.xlu0 %v1197, 56
        %v1248 = vpop.permute.xlu0 %1247
        %1249 = vrot.lane.b32.xlu0 %v1204, 56
        %v1250 = vpop.permute.xlu0 %1249
        %1251 = vrot.lane.b32.xlu0 %v1211, 56
        %v1252 = vpop.permute.xlu0 %1251
        %1253 = vrot.lane.b32.xlu0 %v1218, 56
        %v1254 = vpop.permute.xlu0 %1253
        %1255 = vrot.lane.b32.xlu0 %v1225, 56
        %v1256 = vpop.permute.xlu0 %1255
        %1257 = vrot.lane.b32.xlu0 %v1232, 56
        %v1258 = vpop.permute.xlu0 %1257
        %1259 = vrot.lane.b32.xlu0 %v1239, 56
        %v1260 = vpop.permute.xlu0 %1259
        %1261 = vrot.lane.b32.xlu0 %v1246, 56
        %v1262 = vpop.permute.xlu0 %1261
        %v1271 = vunpack.c.l.b16 %v775
        %v1272 = vunpack.c.l.b16 %v776
        %v1273 = vunpack.c.l.b16 %v777
        %v1274 = vunpack.c.l.b16 %v778
        %v1275 = vunpack.c.l.b16 %v779
        %v1276 = vunpack.c.l.b16 %v780
        %v1277 = vunpack.c.l.b16 %v781
        %v1278 = vunpack.c.l.b16 %v782
        %v1279 = vpack.c.b16 %v1175, %v1271
        %v1280 = vpack.c.b16 %v1176, %v1272
        %v1281 = vpack.c.b16 %v1177, %v1273
        %v1282 = vpack.c.b16 %v1178, %v1274
        %v1283 = vpack.c.b16 %v1179, %v1275
        %v1284 = vpack.c.b16 %v1180, %v1276
        %v1285 = vpack.c.b16 %v1181, %v1277
        %v1286 = vpack.c.b16 %v1182, %v1278
        %v1287 = vrot.slane %v1279, 1
        %v1288 = vrot.slane %v1280, 1
        %v1289 = vrot.slane %v1281, 1
        %v1290 = vrot.slane %v1282, 1
        %v1291 = vrot.slane %v1283, 1
        %v1292 = vrot.slane %v1284, 1
        %v1293 = vrot.slane %v1285, 1
        %v1294 = vrot.slane %v1286, 1
        %1295 = vrot.lane.b32.xlu0 %v1287, 64
        %v1296 = vpop.permute.xlu0 %1295
        %1297 = vrot.lane.b32.xlu0 %v1288, 64
        %v1298 = vpop.permute.xlu0 %1297
        %1299 = vrot.lane.b32.xlu0 %v1289, 64
        %v1300 = vpop.permute.xlu0 %1299
        %1301 = vrot.lane.b32.xlu0 %v1290, 64
        %v1302 = vpop.permute.xlu0 %1301
        %1303 = vrot.lane.b32.xlu0 %v1291, 64
        %v1304 = vpop.permute.xlu0 %1303
        %1305 = vrot.lane.b32.xlu0 %v1292, 64
        %v1306 = vpop.permute.xlu0 %1305
        %1307 = vrot.lane.b32.xlu0 %v1293, 64
        %v1308 = vpop.permute.xlu0 %1307
        %1309 = vrot.lane.b32.xlu0 %v1294, 64
        %v1310 = vpop.permute.xlu0 %1309
        %vm1311 = vcmask 64512
        %v1314 = vsel %vm1311, %v710, %v880
        %v1317 = vsel %vm1311, %v711, %v882
        %v1320 = vsel %vm1311, %v712, %v884
        %v1323 = vsel %vm1311, %v713, %v886
        %v1326 = vsel %vm1311, %v714, %v888
        %v1329 = vsel %vm1311, %v715, %v890
        %v1332 = vsel %vm1311, %v716, %v892
        %v1335 = vsel %vm1311, %v717, %v894
        %vm1336 = vcmask 130048
        %v1338 = vsel %vm1336, %v1314, %v928
        %v1340 = vsel %vm1336, %v1317, %v930
        %v1342 = vsel %vm1336, %v1320, %v932
        %v1344 = vsel %vm1336, %v1323, %v934
        %v1346 = vsel %vm1336, %v1326, %v936
        %v1348 = vsel %vm1336, %v1329, %v938
        %v1350 = vsel %vm1336, %v1332, %v940
        %v1352 = vsel %vm1336, %v1335, %v942
        %vm1353 = vcmask 195584
        %v1355 = vsel %vm1353, %v1338, %v968
        %v1357 = vsel %vm1353, %v1340, %v970
        %v1359 = vsel %vm1353, %v1342, %v972
        %v1361 = vsel %vm1353, %v1344, %v974
        %v1363 = vsel %vm1353, %v1346, %v976
        %v1365 = vsel %vm1353, %v1348, %v978
        %v1367 = vsel %vm1353, %v1350, %v980
        %v1369 = vsel %vm1353, %v1352, %v982
        %vm1370 = vcmask 261120
        %v1372 = vsel %vm1370, %v1355, %v1064
        %v1374 = vsel %vm1370, %v1357, %v1066
        %v1376 = vsel %vm1370, %v1359, %v1068
        %v1378 = vsel %vm1370, %v1361, %v1070
        %v1380 = vsel %vm1370, %v1363, %v1072
        %v1382 = vsel %vm1370, %v1365, %v1074
        %v1384 = vsel %vm1370, %v1367, %v1076
        %v1386 = vsel %vm1370, %v1369, %v1078
        %vm1387 = vcmask 326656
        %v1389 = vsel %vm1387, %v1372, %v1112
        %v1391 = vsel %vm1387, %v1374, %v1114
        %v1393 = vsel %vm1387, %v1376, %v1116
        %v1395 = vsel %vm1387, %v1378, %v1118
        %v1397 = vsel %vm1387, %v1380, %v1120
        %v1399 = vsel %vm1387, %v1382, %v1122
        %v1401 = vsel %vm1387, %v1384, %v1124
        %v1403 = vsel %vm1387, %v1386, %v1126
        %vm1404 = vcmask 392192
        %v1406 = vsel %vm1404, %v1389, %v1152
        %v1408 = vsel %vm1404, %v1391, %v1154
        %v1410 = vsel %vm1404, %v1393, %v1156
        %v1412 = vsel %vm1404, %v1395, %v1158
        %v1414 = vsel %vm1404, %v1397, %v1160
        %v1416 = vsel %vm1404, %v1399, %v1162
        %v1418 = vsel %vm1404, %v1401, %v1164
        %v1420 = vsel %vm1404, %v1403, %v1166
        %vm1421 = vcmask 457728
        %v1423 = vsel %vm1421, %v1406, %v1248
        %v1425 = vsel %vm1421, %v1408, %v1250
        %v1427 = vsel %vm1421, %v1410, %v1252
        %v1429 = vsel %vm1421, %v1412, %v1254
        %v1431 = vsel %vm1421, %v1414, %v1256
        %v1433 = vsel %vm1421, %v1416, %v1258
        %v1435 = vsel %vm1421, %v1418, %v1260
        %v1437 = vsel %vm1421, %v1420, %v1262
        %vm1438 = vcmask 523264
        %v1440 = vsel %vm1438, %v1423, %v1296
        %v1442 = vsel %vm1438, %v1425, %v1298
        %v1444 = vsel %vm1438, %v1427, %v1300
        %v1446 = vsel %vm1438, %v1429, %v1302
        %v1448 = vsel %vm1438, %v1431, %v1304
        %v1450 = vsel %vm1438, %v1433, %v1306
        %v1452 = vsel %vm1438, %v1435, %v1308
        %v1454 = vsel %vm1438, %v1437, %v1310
        %v1455 = vld [vmem:[%s2] sm:$0xf]
        %v1456 = vld [vmem:[%s2 + $0x4] sm:$0xf]
        %v1457 = vld [vmem:[%s2 + $0x8] sm:$0xf]
        %v1458 = vld [vmem:[%s2 + $0xc] sm:$0xf]
        %v1459 = vld [vmem:[%s2 + $0x10] sm:$0xf]
        %v1460 = vld [vmem:[%s2 + $0x14] sm:$0xf]
        %v1461 = vld [vmem:[%s2 + $0x18] sm:$0xf]
        %v1462 = vld [vmem:[%s2 + $0x1c] sm:$0xf]
        %v1463 = vld [vmem:[%s2 + $0x20] sm:$0xf]
        %v1464 = vld [vmem:[%s5] sm:$0x1]
        %v1466 = vlaneseq
        %v1467 = vshrl.u32 %v1466, 7
        %v1468 = vsub.s32 0, %v1467
        %v1469 = vrot.slane %v1464, %v1468
        %v1479 = vunpack.c.l.b16 %v1440
        %v1480 = vunpack.c.l.b16 %v1442
        %v1481 = vunpack.c.l.b16 %v1444
        %v1482 = vunpack.c.l.b16 %v1446
        %v1483 = vunpack.c.l.b16 %v1448
        %v1484 = vunpack.c.l.b16 %v1450
        %v1485 = vunpack.c.l.b16 %v1452
        %v1486 = vunpack.c.l.b16 %v1454
        %v1487 = vpack.c.b16 %v1480, %v1479
        %v1488 = vpack.c.b16 %v1482, %v1481
        %v1489 = vpack.c.b16 %v1484, %v1483
        %v1490 = vpack.c.b16 %v1486, %v1485
        %v1500 = vunpack.c.l.b16 %v1455
        %v1501 = vunpack.c.l.b16 %v1456
        %v1502 = vunpack.c.l.b16 %v1457
        %v1503 = vunpack.c.l.b16 %v1458
        %v1504 = vunpack.c.l.b16 %v1459
        %v1505 = vunpack.c.l.b16 %v1460
        %v1506 = vunpack.c.l.b16 %v1461
        %v1507 = vunpack.c.l.b16 %v1462
        %v1508 = vunpack.c.l.b16 %v1463
        %v1509 = vpack.c.b16 %v1501, %v1500
        %v1510 = vpack.c.b16 %v1503, %v1502
        %v1511 = vpack.c.b16 %v1505, %v1504
        %v1512 = vpack.c.b16 %v1507, %v1506
        %v1513 = vpack.c.b16 %v1508, %v1508
        %vm1518 = vcmask 588800
        %v1520 = vsel %vm1518, %v1487, 0
        %v1523 = vsel %vm1518, %v1488, 0
        %v1526 = vsel %vm1518, %v1489, 0
        %v1529 = vsel %vm1518, %v1490, 0
        %vm1531 = vcmask 1043456
        %v1533 = vsel %vm1531, %v1513, 0
        %1535 = vmatprep.subr.bf16.mxu0 0
        %1536 = vmatpush1.bf16.msra.mxu0 %v1509
        %1537 = vmatprep.subr.bf16.mxu0 0
        %1538 = vmatpush1.bf16.msra.mxu0 %v1510
        %1539 = vmatprep.subr.bf16.mxu0 0
        %1540 = vmatpush1.bf16.msra.mxu0 %v1511
        %1541 = vmatprep.subr.bf16.mxu0 0
        %1542 = vmatpush1.bf16.msra.mxu0 %v1512
        %1543 = vmatprep.subr.bf16.mxu0 0
        %1544 = vmatpush1.bf16.msra.mxu0 %v1533
        %1545 = vmatprep.subr.bf16.mxu0 0
        %1546 = vmatpush1.bf16.msra.mxu0 0
        %1547 = vmatprep.subr.bf16.mxu0 0
        %1548 = vmatpush1.bf16.msra.mxu0 0
        %1549 = vmatprep.subr.bf16.mxu0 0
        %1550 = vmatpush1.bf16.msra.mxu0 0
        %1551 = vmatprep.subr.bf16.mxu0 0
        %1552 = vmatpush1.bf16.msra.mxu0 0
        %1553 = vmatprep.subr.bf16.mxu0 0
        %1554 = vmatpush1.bf16.msra.mxu0 0
        %1555 = vmatprep.subr.bf16.mxu0 0
        %1556 = vmatpush1.bf16.msra.mxu0 0
        %1557 = vmatprep.subr.bf16.mxu0 0
        %1558 = vmatpush1.bf16.msra.mxu0 0
        %1559 = vmatprep.subr.bf16.mxu0 0
        %1560 = vmatpush1.bf16.msra.mxu0 0
        %1561 = vmatprep.subr.bf16.mxu0 0
        %1562 = vmatpush1.bf16.msra.mxu0 0
        %1563 = vmatprep.subr.bf16.mxu0 0
        %1564 = vmatpush1.bf16.msra.mxu0 0
        %1565 = vmatprep.subr.bf16.mxu0 0
        %1566 = vmatpush1.bf16.msra.mxu0 0
        %1567 = vmatprep.mubr.bf16.mxu0 0
        %1568 = vmatmul.mubr.bf16.gmra.mrb[0].mxu0 %v1520
        %v1569 = vpop.f32.mrb[0].mxu0
        %v1570 = vadd.f32 %v1469, %v1569
        %v1571 = vpop.f32.mrb[0].mxu0
        %v1572 = vpop.f32.mrb[0].mxu0
        %v1573 = vadd.f32 %v1469, %v1572
        %v1574 = vpop.f32.mrb[0].mxu0
        %1575 = vmatprep.mubr.bf16.mxu0 0
        %1576 = vmatmul.mubr.bf16.gmra.mrb[0].mxu0 %v1523
        %v1577 = vpop.f32.mrb[0].mxu0
        %v1578 = vadd.f32 %v1469, %v1577
        %v1579 = vpop.f32.mrb[0].mxu0
        %v1580 = vpop.f32.mrb[0].mxu0
        %v1581 = vadd.f32 %v1469, %v1580
        %v1582 = vpop.f32.mrb[0].mxu0
        %1583 = vmatprep.mubr.bf16.mxu0 0
        %1584 = vmatmul.mubr.bf16.gmra.mrb[0].mxu0 %v1526
        %v1585 = vpop.f32.mrb[0].mxu0
        %v1586 = vadd.f32 %v1469, %v1585
        %v1587 = vpop.f32.mrb[0].mxu0
        %v1588 = vpop.f32.mrb[0].mxu0
        %v1589 = vadd.f32 %v1469, %v1588
        %v1590 = vpop.f32.mrb[0].mxu0
        %1591 = vmatprep.mubr.bf16.mxu0 0
        %1592 = vmatmul.mubr.bf16.gmra.mrb[0].mxu0 %v1529
        %v1593 = vpop.f32.mrb[0].mxu0
        %v1594 = vadd.f32 %v1469, %v1593
        %v1595 = vpop.f32.mrb[0].mxu0
        %v1596 = vpop.f32.mrb[0].mxu0
        %v1597 = vadd.f32 %v1469, %v1596
        %v1598 = vpop.f32.mrb[0].mxu0
        %1599 = vdwg.mxu0
        %v1600 = vmax.f32 %v1570, 0.0
        %v1601 = vmax.f32 %v1573, 0.0
        %v1602 = vmax.f32 %v1578, 0.0
        %v1603 = vmax.f32 %v1581, 0.0
        %v1604 = vmax.f32 %v1586, 0.0
        %v1605 = vmax.f32 %v1589, 0.0
        %v1606 = vmax.f32 %v1594, 0.0
        %v1607 = vmax.f32 %v1597, 0.0
        %v1608 = vpack.c.bf16 %v1601, %v1600
        %v1609 = vpack.c.bf16 %v1603, %v1602
        %v1610 = vpack.c.bf16 %v1605, %v1604
        %v1611 = vpack.c.bf16 %v1607, %v1606
        %v1612 = vld [vmem:[%s3] sm:$0xf]
        %v1613 = vld [vmem:[%s6] sm:$0x1]
        %v1615 = vlaneseq
        %v1616 = vshrl.u32 %v1615, 7
        %v1617 = vsub.s32 0, %v1616
        %v1618 = vrot.slane %v1613, %v1617
        %v1621 = vsel %vm1311, %v1608, 0
        %v1624 = vsel %vm1311, %v1609, 0
        %v1627 = vsel %vm1311, %v1610, 0
        %v1630 = vsel %vm1311, %v1611, 0
        %v1633 = vsel %vm1531, %v1612, 0
        %1635 = vmatprep.subr.bf16.mxu0 0
        %1636 = vmatpush1.bf16.msra.mxu0 %v1633
        %1637 = vmatprep.subr.bf16.mxu0 0
        %1638 = vmatpush1.bf16.msra.mxu0 0
        %1639 = vmatprep.subr.bf16.mxu0 0
        %1640 = vmatpush1.bf16.msra.mxu0 0
        %1641 = vmatprep.subr.bf16.mxu0 0
        %1642 = vmatpush1.bf16.msra.mxu0 0
        %1643 = vmatprep.subr.bf16.mxu0 0
        %1644 = vmatpush1.bf16.msra.mxu0 0
        %1645 = vmatprep.subr.bf16.mxu0 0
        %1646 = vmatpush1.bf16.msra.mxu0 0
        %1647 = vmatprep.subr.bf16.mxu0 0
        %1648 = vmatpush1.bf16.msra.mxu0 0
        %1649 = vmatprep.subr.bf16.mxu0 0
        %1650 = vmatpush1.bf16.msra.mxu0 0
        %1651 = vmatprep.subr.bf16.mxu0 0
        %1652 = vmatpush1.bf16.msra.mxu0 0
        %1653 = vmatprep.subr.bf16.mxu0 0
        %1654 = vmatpush1.bf16.msra.mxu0 0
        %1655 = vmatprep.subr.bf16.mxu0 0
        %1656 = vmatpush1.bf16.msra.mxu0 0
        %1657 = vmatprep.subr.bf16.mxu0 0
        %1658 = vmatpush1.bf16.msra.mxu0 0
        %1659 = vmatprep.subr.bf16.mxu0 0
        %1660 = vmatpush1.bf16.msra.mxu0 0
        %1661 = vmatprep.subr.bf16.mxu0 0
        %1662 = vmatpush1.bf16.msra.mxu0 0
        %1663 = vmatprep.subr.bf16.mxu0 0
        %1664 = vmatpush1.bf16.msra.mxu0 0
        %1665 = vmatprep.subr.bf16.mxu0 0
        %1666 = vmatpush1.bf16.msra.mxu0 0
        %1667 = vmatprep.mubr.bf16.mxu0 0
        %1668 = vmatmul.mubr.bf16.gmra.mrb[0].mxu0 %v1621
        %v1669 = vpop.f32.mrb[0].mxu0
        %v1670 = vadd.f32 %v1618, %v1669
        %v1671 = vpop.f32.mrb[0].mxu0
        %v1672 = vpop.f32.mrb[0].mxu0
        %v1673 = vadd.f32 %v1618, %v1672
        %v1674 = vpop.f32.mrb[0].mxu0
        %1675 = vmatprep.mubr.bf16.mxu0 0
        %1676 = vmatmul.mubr.bf16.gmra.mrb[0].mxu0 %v1624
        %v1677 = vpop.f32.mrb[0].mxu0
        %v1678 = vadd.f32 %v1618, %v1677
        %v1679 = vpop.f32.mrb[0].mxu0
        %v1680 = vpop.f32.mrb[0].mxu0
        %v1681 = vadd.f32 %v1618, %v1680
        %v1682 = vpop.f32.mrb[0].mxu0
        %1683 = vmatprep.mubr.bf16.mxu0 0
        %1684 = vmatmul.mubr.bf16.gmra.mrb[0].mxu0 %v1627
        %v1685 = vpop.f32.mrb[0].mxu0
        %v1686 = vadd.f32 %v1618, %v1685
        %v1687 = vpop.f32.mrb[0].mxu0
        %v1688 = vpop.f32.mrb[0].mxu0
        %v1689 = vadd.f32 %v1618, %v1688
        %v1690 = vpop.f32.mrb[0].mxu0
        %1691 = vmatprep.mubr.bf16.mxu0 0
        %1692 = vmatmul.mubr.bf16.gmra.mrb[0].mxu0 %v1630
        %v1693 = vpop.f32.mrb[0].mxu0
        %v1694 = vadd.f32 %v1618, %v1693
        %v1695 = vpop.f32.mrb[0].mxu0
        %v1696 = vpop.f32.mrb[0].mxu0
        %v1697 = vadd.f32 %v1618, %v1696
        %v1698 = vpop.f32.mrb[0].mxu0
        %1699 = vdwg.mxu0
        %v1700 = vld [vmem:[%s271] sm:$0xf]
        %v1701 = vld [vmem:[%s271 + $0x4] sm:$0xf]
        %v1702 = vld [vmem:[%s271 + $0x8] sm:$0xf]
        %v1703 = vld [vmem:[%s271 + $0xc] sm:$0xf]
        %v1704 = vld [vmem:[%s271 + $0x10] sm:$0xf]
        %v1705 = vld [vmem:[%s271 + $0x14] sm:$0xf]
        %v1706 = vld [vmem:[%s271 + $0x18] sm:$0xf]
        %v1707 = vld [vmem:[%s271 + $0x1c] sm:$0xf]
        %v1708 = vunpack.c.l.bf16 %v1700
        %v1709 = vunpack.c.l.bf16 %v1701
        %v1710 = vunpack.c.l.bf16 %v1702
        %v1711 = vunpack.c.l.bf16 %v1703
        %v1712 = vunpack.c.l.bf16 %v1704
        %v1713 = vunpack.c.l.bf16 %v1705
        %v1714 = vunpack.c.l.bf16 %v1706
        %v1715 = vunpack.c.l.bf16 %v1707
        %v1716 = vadd.f32 %v1670, %v1708
        %v1717 = vadd.f32 %v1673, %v1709
        %v1718 = vadd.f32 %v1678, %v1710
        %v1719 = vadd.f32 %v1681, %v1711
        %v1720 = vadd.f32 %v1686, %v1712
        %v1721 = vadd.f32 %v1689, %v1713
        %v1722 = vadd.f32 %v1694, %v1714
        %v1723 = vadd.f32 %v1697, %v1715
        %v1724 = vmax.f32 %v1716, 0.0
        %v1725 = vmax.f32 %v1717, 0.0
        %v1726 = vmax.f32 %v1718, 0.0
        %v1727 = vmax.f32 %v1719, 0.0
        %v1728 = vmax.f32 %v1720, 0.0
        %v1729 = vmax.f32 %v1721, 0.0
        %v1730 = vmax.f32 %v1722, 0.0
        %v1731 = vmax.f32 %v1723, 0.0
        %v1732 = vpack.c.bf16 %v1724, %v1724
        %v1733 = vpack.c.bf16 %v1725, %v1725
        %v1734 = vpack.c.bf16 %v1726, %v1726
        %v1735 = vpack.c.bf16 %v1727, %v1727
        %v1736 = vpack.c.bf16 %v1728, %v1728
        %v1737 = vpack.c.bf16 %v1729, %v1729
        %v1738 = vpack.c.bf16 %v1730, %v1730
        %v1739 = vpack.c.bf16 %v1731, %v1731
        %1740 = vst.msk [vmem:[%s271] sm:$0xf] %vm472, %v1732
        %1741 = vst.msk [vmem:[%s271 + $0x4] sm:$0xf] %vm472, %v1733
        %1742 = vst.msk [vmem:[%s271 + $0x8] sm:$0xf] %vm472, %v1734
        %1743 = vst.msk [vmem:[%s271 + $0xc] sm:$0xf] %vm472, %v1735
        %1744 = vst.msk [vmem:[%s271 + $0x10] sm:$0xf] %vm472, %v1736
        %1745 = vst.msk [vmem:[%s271 + $0x14] sm:$0xf] %vm472, %v1737
        %1746 = vst.msk [vmem:[%s271 + $0x18] sm:$0xf] %vm472, %v1738
        %1747 = vst.msk [vmem:[%s271 + $0x1c] sm:$0xf] %vm472, %v1739
        %s1748 = sand.u32 %s181, 1
        %s1749 = scalar_lea.sflag [#allocation4], %s1748
        %s1750 = sand.u32 %s181, 1
        %s1751 = smul.addr %s1750, 32
        %s1752 = scalar_lea.vmem [#allocation3], %s1751
        // Predicated region
        $region49: #{tpu_custom_call.1} parent=47 // pred_check
          %p1753 = pneg %p191
        $region50: #{tpu_custom_call.1} parent=47 // pred_check_branch
          %1755 = sbr.rel (%p1753) target = $region52
        $region51: #{tpu_custom_call.1} parent=47 // pred_region
          %s1757 = ssub.s32 512, 512
          %1758 = vsyncadd %s1749, %s1757
          %s1759 = smul.addr %s21, 8
          %s1760 = smul.addr %s1759, 64
          %s1761 = scalar_lea.hbm %s7, %s1760
          %s1762 = sshll.u32 %s1752, 4
          %s1763 = int_to_ptr.vmem [resolvable:$true] %s1762
          %1768 = dma.vmem_to_hbm [thread:$0]  %s1763, 512, %s1761, %s1749, 64, 64, 4
        $region52: #{tpu_custom_call.1} parent=47 // pred_fallthru
          _
      $region48: #{tpu_custom_call.1} parent=5 // pred_fallthru
        _
      %p1769 = scmp.le.s32.totalorder 2, %s16
      // Predicated region
      $region53: #{tpu_custom_call.1} parent=5 // pred_check
        %p1770 = pneg %p1769
      $region54: #{tpu_custom_call.1} parent=5 // pred_check_branch
        %1772 = sbr.rel (%p1770) target = $region56
      $region55: #{tpu_custom_call.1} parent=5 // pred_region
        %s1773 = ssub.s32 %s16, 2
        // Predicated region
        $region57: #{tpu_custom_call.1} parent=55 // pred_check
          %p1774 = pneg %p197
        $region58: #{tpu_custom_call.1} parent=55 // pred_check_branch
          %1776 = sbr.rel (%p1774) target = $region60
        $region59: #{tpu_custom_call.1} parent=55 // pred_region
          %s1777 = sand.u32 %s182, 1
          %s1778 = scalar_lea.sflag [#allocation4], %s1777
          %s1779 = sand.u32 %s182, 1
          %s1780 = smul.addr %s1779, 32
          %s1781 = scalar_lea.vmem [#allocation3], %s1780
          %1782 = dma.done %s1778, 512
        $region60: #{tpu_custom_call.1} parent=55 // pred_fallthru
          _
      $region56: #{tpu_custom_call.1} parent=5 // pred_fallthru
        _
    $region6: #{tpu_custom_call.1} parent=1 // loop_footer
      %s20 = sadd.s32 1, %s16
    $region7: #{tpu_custom_call.1} parent=1 // loop_footer_branch
      %15 = sbr.rel target = $region3
    $region8: #{tpu_custom_call.1} parent=1 // loop_exit
      _
    %1783 = vsyncpa [#allocation4], 1
    %s1784 = scalar_lea.sflag [#allocation4], 1
    %1785 = vsyncpa %s1784, 1

</llo_original>
